<compile_context>
chip_gen: v7x
topology: tpu7x:2x2x1
jax: 0.10.0
libtpu: 0.0.40
codegen_flags: <defaults>
</compile_context>

<pallas_src>
import functools

import jax
import jax.numpy as jnp
import numpy as np
from jax.experimental import pallas as pl
from jax.experimental.pallas import tpu as pltpu


# ---------------------------------------------------------------------------
# helpers
# ---------------------------------------------------------------------------

def _round_up(v, m):
    return ((v + m - 1) // m) * m


def _pad2(a, rows, cols):
    return jnp.pad(a, ((0, rows - a.shape[0]), (0, cols - a.shape[1])))


# ---------------------------------------------------------------------------
# kernel bodies
# ---------------------------------------------------------------------------

def _heads_and_store(feat, w12c_ref, b12c_ref, w2_ref, b2_ref,
                     sup_ref, cls_ref, *, h_pad):
    """sup_con_head + L2-normalize + cls_head on the f32 backbone features.

    w12c is [w1 | wc] concatenated along the lane axis (each padded to 128
    lanes): one 256-wide MXU pass computes both heads' first matmul; the
    split at lane h_pad is lane-aligned and therefore free.  Head math stays
    in f32 for parity with the PyTorch model (K <= 128, off the critical
    path).
    """
    hc = jnp.dot(feat, w12c_ref[...],
                 preferred_element_type=jnp.float32) + b12c_ref[...]
    h = jnp.maximum(hc[:, :h_pad], 0.0)                       # ReLU
    s = jnp.dot(h, w2_ref[...],
                preferred_element_type=jnp.float32) + b2_ref[...]
    # F.normalize(x) = x / max(||x||, 1e-12) == x * rsqrt(max(||x||^2, 1e-24))
    sq = jnp.sum(s * s, axis=-1, keepdims=True)
    sup_ref[...] = s * jax.lax.rsqrt(jnp.maximum(sq, 1e-24))   # EUP rsqrt
    # cls_head on backbone features (.detach() has no forward effect).
    # TODO(synk): train-phase first-half batch tiles could skip this store via
    # a scalar-prefetch row threshold + pl.when; the matmul itself is already
    # fused into hc so only the tiny writeback would be saved.
    cls_ref[...] = hc[:, h_pad:]


def _sup_con_kernel(x_ref, wb_ref, bb_ref, w12c_ref, b12c_ref, w2_ref, b2_ref,
                    sup_ref, cls_ref, *, h_pad):
    """Single-shot kernel: the whole K = C*H*W contraction fits in VMEM."""
    feat = jnp.dot(x_ref[...].astype(jnp.bfloat16), wb_ref[...],
                   preferred_element_type=jnp.float32) + bb_ref[...]
    _heads_and_store(feat, w12c_ref, b12c_ref, w2_ref, b2_ref,
                     sup_ref, cls_ref, h_pad=h_pad)


def _sup_con_kernel_ktiled(x_ref, wb_ref, bb_ref, w12c_ref, b12c_ref,
                           w2_ref, b2_ref, sup_ref, cls_ref, acc_ref, *, h_pad):
    """K-tiled variant for large in_features (f32 accumulator scratch)."""
    k = pl.program_id(1)

    @pl.when(k == 0)
    def _():
        acc_ref[...] = jnp.zeros_like(acc_ref)

    acc_ref[...] += jnp.dot(x_ref[...].astype(jnp.bfloat16), wb_ref[...],
                            preferred_element_type=jnp.float32)

    @pl.when(k == pl.num_programs(1) - 1)
    def _():
        feat = acc_ref[...] + bb_ref[...]
        _heads_and_store(feat, w12c_ref, b12c_ref, w2_ref, b2_ref,
                         sup_ref, cls_ref, h_pad=h_pad)


# ---------------------------------------------------------------------------
# params
# ---------------------------------------------------------------------------

def init_params(key, in_features, embed_dim, num_classes, sup_out_dim=768):
    """Unpadded f32 params (torch-layout-equivalent, W is [in, out])."""
    ks = jax.random.split(key, 8)
    scale = 0.02
    wb = scale * jax.random.normal(ks[0], (in_features, embed_dim), jnp.float32)
    bb = scale * jax.random.normal(ks[1], (1, embed_dim), jnp.float32)
    w1 = scale * jax.random.normal(ks[2], (embed_dim, embed_dim // 2), jnp.float32)
    b1 = scale * jax.random.normal(ks[3], (1, embed_dim // 2), jnp.float32)
    w2 = scale * jax.random.normal(ks[4], (embed_dim // 2, sup_out_dim), jnp.float32)
    b2 = scale * jax.random.normal(ks[5], (1, sup_out_dim), jnp.float32)
    wc = scale * jax.random.normal(ks[6], (embed_dim, num_classes), jnp.float32)
    bc = scale * jax.random.normal(ks[7], (1, num_classes), jnp.float32)
    return (wb, bb, w1, b1, w2, b2, wc, bc)


def prepare_params(params, *, tk=None, tm_max=256, vmem_budget_bytes=32 << 20):
    """Pad lane dims to 128 (zero fill) once; fuse [w1|wc]; pick tk."""
    wb, bb, w1, b1, w2, b2, wc, bc = params
    din, e = wb.shape
    h = w1.shape[1]
    sup = w2.shape[1]
    c = wc.shape[1]

    e_pad = _round_up(e, 128)
    h_pad = _round_up(h, 128)
    sup_pad = _round_up(sup, 128)
    c_pad = _round_up(c, 128)
    din128 = _round_up(din, 128)

    if tk is None:
        # Size tk so double-buffered x(f32) + wb(bf16) K-tiles use <= ~1/4 of
        # the scoped-VMEM budget (leaves headroom on v7x's 64 MiB VMEM).
        per_col = 2 * (tm_max * 4 + e_pad * 2)
        tk = max(128, ((vmem_budget_bytes // 4) // per_col) // 128 * 128)
    tk = min(_round_up(tk, 128), din128)
    din_pad = _round_up(din, tk)

    # Fused [w1 | wc] first-stage head weight + [b1 | bc] bias.
    w12c = jnp.concatenate([_pad2(w1, e_pad, h_pad), _pad2(wc, e_pad, c_pad)],
                           axis=1)
    b12c = jnp.concatenate([_pad2(b1, 1, h_pad), _pad2(bc, 1, c_pad)], axis=1)

    # TODO(synk): on v7x, wb could be stored fp8 e4m3 with per-column scales
    # to halve weight DMA for large in_features; kept bf16 here for accuracy
    # and v5e/v6e compatibility.
    return dict(
        wb=_pad2(wb, din_pad, e_pad).astype(jnp.bfloat16),
        bb=_pad2(bb, 1, e_pad).astype(jnp.float32),
        w12c=w12c.astype(jnp.float32),
        b12c=b12c.astype(jnp.float32),
        w2=_pad2(w2, h_pad, sup_pad).astype(jnp.float32),
        b2=_pad2(b2, 1, sup_pad).astype(jnp.float32),
        dims=dict(din=din, e=e, h=h, sup=sup, c=c, tk=tk,
                  din_pad=din_pad, e_pad=e_pad, h_pad=h_pad,
                  sup_pad=sup_pad, c_pad=c_pad),
    )


# ---------------------------------------------------------------------------
# forward
# ---------------------------------------------------------------------------

def _pick_tm(n):
    if n >= 512:
        return 256                                   # fills MXU M on v6e/v7x
    if n >= 16:
        # >= 2 batch tiles so megacore / v7x's second TensorCore has work.
        return min(128, _round_up((n + 1) // 2, 8))
    return _round_up(max(n, 1), 8)


def sup_con_forward(x_nchw, prepared, phase="train", *, tm=None):
    """Pallas implementation of SupConModel.forward."""
    d = prepared["dims"]
    n = x_nchw.shape[0]
    x_flat = x_nchw.reshape(n, -1).astype(jnp.float32)  # row-major == torch .view(N,-1)
    assert x_flat.shape[1] == d["din"]
    if phase == "train":
        assert n % 2 == 0, "train phase expects an even batch (two stacked views)"

    if tm is None:
        tm = _pick_tm(n)
    n_pad = _round_up(n, tm)
    tk, din_pad = d["tk"], d["din_pad"]
    e_pad, h_pad = d["e_pad"], d["h_pad"]
    sup_pad, c_pad = d["sup_pad"], d["c_pad"]
    hc_pad = h_pad + c_pad

    # Only the tiny N/K edge pad is materialized; x stays f32 in HBM and the
    # bf16 cast happens in-kernel (VPU, hidden under the MXU).
    x_p = _pad2(x_flat, n_pad, din_pad)

    n_k = din_pad // tk
    k_tiled = n_k > 1
    kx = din_pad if not k_tiled else tk

    # Explicit scoped-VMEM limit, sized from the footprint, capped at 48 MiB.
    foot = (2 * tm * kx * 4                                   # x tile (f32), 2 bufs
            + 2 * kx * e_pad * 2                              # wb tile (bf16), 2 bufs
            + 2 * (e_pad * hc_pad + h_pad * sup_pad
                   + e_pad + hc_pad + sup_pad) * 4            # head weights + biases
            + 2 * tm * (sup_pad + c_pad) * 4                  # outputs
            + (tm * e_pad * 4 if k_tiled else 0))             # accumulator scratch
    vmem_limit = int(min(48 << 20, max(32 << 20, 2 * foot)))

    # NOTE: outputs stay f32 for torch parity; emit bf16 here if the loss
    # tolerates it to halve the [n, 768] sup writeback.
    out_shape = (jax.ShapeDtypeStruct((n_pad, sup_pad), jnp.float32),
                 jax.ShapeDtypeStruct((n_pad, c_pad), jnp.float32))

    if not k_tiled:
        grid = (n_pad // tm,)
        kernel = functools.partial(_sup_con_kernel, h_pad=h_pad)
        in_specs = [
            pl.BlockSpec((tm, din_pad), lambda i: (i, 0)),      # x tile
            pl.BlockSpec((din_pad, e_pad), lambda i: (0, 0)),   # wb (constant)
            pl.BlockSpec((1, e_pad), lambda i: (0, 0)),         # bb
            pl.BlockSpec((e_pad, hc_pad), lambda i: (0, 0)),    # [w1|wc]
            pl.BlockSpec((1, hc_pad), lambda i: (0, 0)),        # [b1|bc]
            pl.BlockSpec((h_pad, sup_pad), lambda i: (0, 0)),   # w2
            pl.BlockSpec((1, sup_pad), lambda i: (0, 0)),       # b2
        ]
        out_specs = (pl.BlockSpec((tm, sup_pad), lambda i: (i, 0)),
                     pl.BlockSpec((tm, c_pad), lambda i: (i, 0)))
        scratch = []
        semantics = ("parallel",)
    else:
        grid = (n_pad // tm, n_k)
        kernel = functools.partial(_sup_con_kernel_ktiled, h_pad=h_pad)
        in_specs = [
            pl.BlockSpec((tm, tk), lambda i, k: (i, k)),        # x tile
            pl.BlockSpec((tk, e_pad), lambda i, k: (k, 0)),     # wb (batch-const)
            pl.BlockSpec((1, e_pad), lambda i, k: (0, 0)),      # bb
            pl.BlockSpec((e_pad, hc_pad), lambda i, k: (0, 0)),  # [w1|wc]
            pl.BlockSpec((1, hc_pad), lambda i, k: (0, 0)),     # [b1|bc]
            pl.BlockSpec((h_pad, sup_pad), lambda i, k: (0, 0)),  # w2
            pl.BlockSpec((1, sup_pad), lambda i, k: (0, 0)),    # b2
        ]
        out_specs = (pl.BlockSpec((tm, sup_pad), lambda i, k: (i, 0)),
                     pl.BlockSpec((tm, c_pad), lambda i, k: (i, 0)))
        scratch = [pltpu.VMEM((tm, e_pad), jnp.float32)]
        semantics = ("parallel", "arbitrary")

    sup_out, cls_out = pl.pallas_call(
        kernel,
        out_shape=out_shape,
        grid_spec=pltpu.PrefetchScalarGridSpec(
            num_scalar_prefetch=0,
            grid=grid,
            in_specs=in_specs,
            out_specs=out_specs,
            scratch_shapes=scratch,
        ),
        compiler_params=pltpu.CompilerParams(
            dimension_semantics=semantics,
            vmem_limit_bytes=vmem_limit,
        ),
    )(x_p, prepared["wb"], prepared["bb"],
      prepared["w12c"], prepared["b12c"], prepared["w2"], prepared["b2"])

    sup_all = sup_out[:n, :d["sup"]]
    cls_all = cls_out[:n, :d["c"]]

    if phase == "train":
        bs = n // 2
        # torch.cat([f1.unsqueeze(1), f2.unsqueeze(1)], dim=1) -> [bs, 2, 768]
        sup_con_logits = jnp.stack([sup_all[:bs], sup_all[bs:]], axis=1)
        cls_logit = cls_all[bs:]
    else:
        sup_con_logits = sup_all
        cls_logit = cls_all
    return sup_con_logits, cls_logit


# pure-JAX reference with identical dtype choices (kernel-correctness check):
# bf16 backbone matmul (f32 accumulation), f32 heads — matching the kernel.
def _reference(x_nchw, prepared, phase="train"):
    d = prepared["dims"]
    n = x_nchw.shape[0]
    xf = x_nchw.reshape(n, -1).astype(jnp.float32)
    xb = _pad2(xf, n, d["din_pad"]).astype(jnp.bfloat16)
    feat = jnp.dot(xb, prepared["wb"],
                   preferred_element_type=jnp.float32) + prepared["bb"]
    hc = jnp.dot(feat, prepared["w12c"],
                 preferred_element_type=jnp.float32) + prepared["b12c"]
    h = jnp.maximum(hc[:, :d["h_pad"]], 0.0)
    cls = hc[:, d["h_pad"]:][:, :d["c"]]
    s = jnp.dot(h, prepared["w2"],
                preferred_element_type=jnp.float32) + prepared["b2"]
    norm = jnp.sqrt(jnp.sum(s * s, axis=-1, keepdims=True))
    sup = (s / jnp.maximum(norm, 1e-12))[:, :d["sup"]]
    if phase == "train":
        bs = n // 2
        return jnp.stack([sup[:bs], sup[bs:]], axis=1), cls[bs:]
    return sup, cls


if __name__ == "__main__":
    key = jax.random.PRNGKey(0)
    k_x, k_p = jax.random.split(key)

    # Train phase: batch is 2*bs (two augmented views stacked along dim 0).
    bs = 2
    C, H, W = 4, 16, 16          # flattened input dim = 1024
    embed_dim = 32
    num_classes = 8

    x = jax.random.normal(k_x, (2 * bs, C, H, W), jnp.float32)
    params = init_params(k_p, C * H * W, embed_dim, num_classes)

    # --- fast path: full K fits in VMEM -> single grid axis, no scratch ----
    prepared = prepare_params(params)
    sup_con_logits, cls_logit = sup_con_forward(x, prepared, phase="train")
    jax.block_until_ready((sup_con_logits, cls_logit))
    assert sup_con_logits.shape == (bs, 2, 768), sup_con_logits.shape
    assert cls_logit.shape == (bs, num_classes), cls_logit.shape

    sup_ref, cls_ref = _reference(x, prepared, phase="train")
    np.testing.assert_allclose(np.asarray(sup_con_logits), np.asarray(sup_ref),
                               atol=1e-2, rtol=1e-2)
    np.testing.assert_allclose(np.asarray(cls_logit), np.asarray(cls_ref),
                               atol=1e-2, rtol=1e-2)

    # --- eval phase ---------------------------------------------------------
    sup_eval, cls_eval = sup_con_forward(x, prepared, phase="eval")
    jax.block_until_ready((sup_eval, cls_eval))
    assert sup_eval.shape == (2 * bs, 768), sup_eval.shape
    assert cls_eval.shape == (2 * bs, num_classes), cls_eval.shape
    sup_ref_e, cls_ref_e = _reference(x, prepared, phase="eval")
    np.testing.assert_allclose(np.asarray(sup_eval), np.asarray(sup_ref_e),
                               atol=1e-2, rtol=1e-2)
    np.testing.assert_allclose(np.asarray(cls_eval), np.asarray(cls_ref_e),
                               atol=1e-2, rtol=1e-2)

    # --- forced K-tiled path (exercises the large-in_features variant) -----
    prepared_kt = prepare_params(params, tk=512)
    sup_kt, cls_kt = sup_con_forward(x, prepared_kt, phase="train")
    jax.block_until_ready((sup_kt, cls_kt))
    np.testing.assert_allclose(np.asarray(sup_kt), np.asarray(sup_ref),
                               atol=1e-2, rtol=1e-2)
    np.testing.assert_allclose(np.asarray(cls_kt), np.asarray(cls_ref),
                               atol=1e-2, rtol=1e-2)

    print("KERNEL_OK")
</pallas_src>

<mosaic_0001>
module attributes {stable_mosaic.version = 11 : i64} {
  func.func @_sup_con_kernel(%arg0: i32, %arg1: memref<8x1024xf32, #tpu.memory_space<vmem>>, %arg2: memref<1024x128xbf16, #tpu.memory_space<vmem>>, %arg3: memref<1x128xf32, #tpu.memory_space<vmem>>, %arg4: memref<128x256xf32, #tpu.memory_space<vmem>>, %arg5: memref<1x256xf32, #tpu.memory_space<vmem>>, %arg6: memref<128x768xf32, #tpu.memory_space<vmem>>, %arg7: memref<1x768xf32, #tpu.memory_space<vmem>>, %arg8: memref<8x768xf32, #tpu.memory_space<vmem>>, %arg9: memref<8x128xf32, #tpu.memory_space<vmem>>) attributes {dimension_semantics = [#tpu.dimension_semantics<parallel>], iteration_bounds = array<i64: 1>, scalar_prefetch = 0 : i64, scratch_operands = 0 : i64, tpu.core_type = #tpu.core_type<tc>, window_params = [{transform_indices = @transform_0, window_bounds = array<i64: 8, 1024>}, {pipeline_mode = #tpu.pipeline_mode<synchronous>, transform_indices = @transform_1, window_bounds = array<i64: 1024, 128>}, {pipeline_mode = #tpu.pipeline_mode<synchronous>, transform_indices = @transform_2, window_bounds = array<i64: 1, 128>}, {pipeline_mode = #tpu.pipeline_mode<synchronous>, transform_indices = @transform_3, window_bounds = array<i64: 128, 256>}, {pipeline_mode = #tpu.pipeline_mode<synchronous>, transform_indices = @transform_4, window_bounds = array<i64: 1, 256>}, {pipeline_mode = #tpu.pipeline_mode<synchronous>, transform_indices = @transform_5, window_bounds = array<i64: 128, 768>}, {pipeline_mode = #tpu.pipeline_mode<synchronous>, transform_indices = @transform_6, window_bounds = array<i64: 1, 768>}, {transform_indices = @transform_7, window_bounds = array<i64: 8, 768>}, {transform_indices = @transform_8, window_bounds = array<i64: 8, 128>}]} {
    %c0 = arith.constant 0 : index
    %c0_0 = arith.constant 0 : index
    %0 = vector.load %arg1[%c0, %c0_0] : memref<8x1024xf32, #tpu.memory_space<vmem>>, vector<8x1024xf32>
    %1 = arith.truncf %0 : vector<8x1024xf32> to vector<8x1024xbf16>
    %c0_1 = arith.constant 0 : index
    %c0_2 = arith.constant 0 : index
    %2 = vector.load %arg2[%c0_1, %c0_2] : memref<1024x128xbf16, #tpu.memory_space<vmem>>, vector<1024x128xbf16>
    %cst = arith.constant dense<0.000000e+00> : vector<8x128xf32>
    %3 = tpu.matmul %1, %2, %cst {dimension_numbers = #tpu.dot_dimension_numbers<[1], [0], [0], [1], [0, 0, 1, 1], [], []>} : vector<8x1024xbf16>, vector<1024x128xbf16>, vector<8x128xf32> -> vector<8x128xf32>
    %c0_3 = arith.constant 0 : index
    %c0_4 = arith.constant 0 : index
    %4 = vector.load %arg3[%c0_3, %c0_4] : memref<1x128xf32, #tpu.memory_space<vmem>>, vector<1x128xf32>
    %5 = vector.broadcast %4 : vector<1x128xf32> to vector<8x128xf32>
    %6 = arith.addf %3, %5 : vector<8x128xf32>
    %c0_5 = arith.constant 0 : index
    %c0_6 = arith.constant 0 : index
    %7 = vector.load %arg4[%c0_5, %c0_6] : memref<128x256xf32, #tpu.memory_space<vmem>>, vector<128x256xf32>
    %cst_7 = arith.constant dense<0.000000e+00> : vector<8x256xf32>
    %8 = tpu.matmul %6, %7, %cst_7 {dimension_numbers = #tpu.dot_dimension_numbers<[1], [0], [0], [1], [0, 0, 1, 1], [], []>} : vector<8x128xf32>, vector<128x256xf32>, vector<8x256xf32> -> vector<8x256xf32>
    %c0_8 = arith.constant 0 : index
    %c0_9 = arith.constant 0 : index
    %9 = vector.load %arg5[%c0_8, %c0_9] : memref<1x256xf32, #tpu.memory_space<vmem>>, vector<1x256xf32>
    %10 = vector.broadcast %9 : vector<1x256xf32> to vector<8x256xf32>
    %11 = arith.addf %8, %10 : vector<8x256xf32>
    %12 = vector.extract_strided_slice %11 {offsets = [0, 0], sizes = [8, 128], strides = [1, 1]} : vector<8x256xf32> to vector<8x128xf32>
    %cst_10 = arith.constant 0.000000e+00 : f32
    %13 = vector.broadcast %cst_10 : f32 to vector<8x128xf32>
    %14 = arith.maximumf %12, %13 : vector<8x128xf32>
    %c0_11 = arith.constant 0 : index
    %c0_12 = arith.constant 0 : index
    %15 = vector.load %arg6[%c0_11, %c0_12] : memref<128x768xf32, #tpu.memory_space<vmem>>, vector<128x768xf32>
    %cst_13 = arith.constant dense<0.000000e+00> : vector<8x768xf32>
    %16 = tpu.matmul %14, %15, %cst_13 {dimension_numbers = #tpu.dot_dimension_numbers<[1], [0], [0], [1], [0, 0, 1, 1], [], []>} : vector<8x128xf32>, vector<128x768xf32>, vector<8x768xf32> -> vector<8x768xf32>
    %c0_14 = arith.constant 0 : index
    %c0_15 = arith.constant 0 : index
    %17 = vector.load %arg7[%c0_14, %c0_15] : memref<1x768xf32, #tpu.memory_space<vmem>>, vector<1x768xf32>
    %18 = vector.broadcast %17 : vector<1x768xf32> to vector<8x768xf32>
    %19 = arith.addf %16, %18 : vector<8x768xf32>
    %20 = arith.mulf %19, %19 : vector<8x768xf32>
    %cst_16 = arith.constant dense<0.000000e+00> : vector<8xf32>
    %21 = vector.multi_reduction <add>, %20, %cst_16 [1] : vector<8x768xf32> to vector<8xf32>
    %22 = vector.shape_cast %21 : vector<8xf32> to vector<8x1xf32>
    %cst_17 = arith.constant 1.000000e-24 : f32
    %23 = vector.broadcast %cst_17 : f32 to vector<8x1xf32>
    %24 = arith.maximumf %22, %23 : vector<8x1xf32>
    %25 = math.rsqrt %24 : vector<8x1xf32>
    %26 = vector.broadcast %25 : vector<8x1xf32> to vector<8x768xf32>
    %27 = arith.mulf %19, %26 : vector<8x768xf32>
    %c0_18 = arith.constant 0 : index
    %c0_19 = arith.constant 0 : index
    %28 = vector.load %arg8[%c0_18, %c0_19] : memref<8x768xf32, #tpu.memory_space<vmem>>, vector<8x768xf32>
    tpu.vector_store %arg8[%c0_18, %c0_19], %27 {strides = array<i32>} : memref<8x768xf32, #tpu.memory_space<vmem>>, vector<8x768xf32>,
    %29 = vector.extract_strided_slice %11 {offsets = [0, 128], sizes = [8, 128], strides = [1, 1]} : vector<8x256xf32> to vector<8x128xf32>
    %c0_20 = arith.constant 0 : index
    %c0_21 = arith.constant 0 : index
    %30 = vector.load %arg9[%c0_20, %c0_21] : memref<8x128xf32, #tpu.memory_space<vmem>>, vector<8x128xf32>
    tpu.vector_store %arg9[%c0_20, %c0_21], %29 {strides = array<i32>} : memref<8x128xf32, #tpu.memory_space<vmem>>, vector<8x128xf32>,
    return
  }
  func.func @transform_0(%arg0: i32) -> (i32, i32) {
    %c0_i32 = arith.constant 0 : i32
    %c0_i32_0 = arith.constant 0 : i32
    return %arg0, %c0_i32 : i32, i32
  }
  func.func @transform_1(%arg0: i32) -> (i32, i32) {
    %c0_i32 = arith.constant 0 : i32
    %c0_i32_0 = arith.constant 0 : i32
    %c0_i32_1 = arith.constant 0 : i32
    return %c0_i32, %c0_i32_0 : i32, i32
  }
  func.func @transform_2(%arg0: i32) -> (i32, i32) {
    %c0_i32 = arith.constant 0 : i32
    %c0_i32_0 = arith.constant 0 : i32
    %c0_i32_1 = arith.constant 0 : i32
    return %c0_i32, %c0_i32_0 : i32, i32
  }
  func.func @transform_3(%arg0: i32) -> (i32, i32) {
    %c0_i32 = arith.constant 0 : i32
    %c0_i32_0 = arith.constant 0 : i32
    %c0_i32_1 = arith.constant 0 : i32
    return %c0_i32, %c0_i32_0 : i32, i32
  }
  func.func @transform_4(%arg0: i32) -> (i32, i32) {
    %c0_i32 = arith.constant 0 : i32
    %c0_i32_0 = arith.constant 0 : i32
    %c0_i32_1 = arith.constant 0 : i32
    return %c0_i32, %c0_i32_0 : i32, i32
  }
  func.func @transform_5(%arg0: i32) -> (i32, i32) {
    %c0_i32 = arith.constant 0 : i32
    %c0_i32_0 = arith.constant 0 : i32
    %c0_i32_1 = arith.constant 0 : i32
    return %c0_i32, %c0_i32_0 : i32, i32
  }
  func.func @transform_6(%arg0: i32) -> (i32, i32) {
    %c0_i32 = arith.constant 0 : i32
    %c0_i32_0 = arith.constant 0 : i32
    %c0_i32_1 = arith.constant 0 : i32
    return %c0_i32, %c0_i32_0 : i32, i32
  }
  func.func @transform_7(%arg0: i32) -> (i32, i32) {
    %c0_i32 = arith.constant 0 : i32
    %c0_i32_0 = arith.constant 0 : i32
    return %arg0, %c0_i32 : i32, i32
  }
  func.func @transform_8(%arg0: i32) -> (i32, i32) {
    %c0_i32 = arith.constant 0 : i32
    %c0_i32_0 = arith.constant 0 : i32
    return %arg0, %c0_i32 : i32, i32
  }
}

</mosaic_0001>

<llo_original>
// kernel: tpu_custom_call.1
$region0: #{tpu_custom_call.1}
  #allocation0 [shape = 'u32[]', space=smem, size = 0x4, offset = 0x4, fixed_abs, tag = 'smem constant byte address 0x4 - core index']
  #allocation1 [shape = 'u32[144,128]{1,0:T(1,128)}', space=vmem, size = 0x12000, scoped, tag = 'internal scratch']
  %s0 = inlined_call_operand.hbm [shape: f32[8,1024], index: 0, kind: input, shape index: {}]
  %s1 = inlined_call_operand.hbm [shape: bf16[1024,128], index: 1, kind: input, shape index: {}]
  %s2 = inlined_call_operand.vmem [shape: f32[1,128], index: 2, kind: input, shape index: {}]
  %s3 = inlined_call_operand.hbm [shape: f32[128,256], index: 3, kind: input, shape index: {}]
  %s4 = inlined_call_operand.vmem [shape: f32[1,256], index: 4, kind: input, shape index: {}]
  %s5 = inlined_call_operand.hbm [shape: f32[128,768], index: 5, kind: input, shape index: {}]
  %s6 = inlined_call_operand.vmem [shape: f32[1,768], index: 6, kind: input, shape index: {}]
  %s7 = inlined_call_operand.hbm [shape: f32[8,768], index: 7, kind: output, shape index: {0}]
  %s8 = inlined_call_operand.hbm [shape: f32[8,128], index: 8, kind: output, shape index: {1}]
  %9 = xla_tuple %s7, %s8
  %s10 = sld [smem:[#allocation0]]
  $region62: #{tpu_custom_call.1} parent=0
    _
  %s12 = ssub.s32 1, %s10
  %s13 = scalar_select 0, %s12, %s10
  $region1: #{tpu_custom_call.1} parent=0
    #allocation2 [shape = 'u8[32768]{0}', space=vmem, size = 0x8000, scoped, tag = 'input window, operand 0, single buffered']
    #allocation3 [shape = 's32[1]{0}', space=sflag, size = 0x4, scoped, tag = 'scoped memory for tpu_custom_call.1']
    #allocation4 [shape = 's32[1]{0}', space=sflag, size = 0x4, scoped, tag = 'scoped memory for tpu_custom_call.1']
    #allocation5 [shape = 'u8[262144]{0}', space=vmem, size = 0x40000, scoped, tag = 'input window, operand 1, single buffered']
    #allocation6 [shape = 's32[1]{0}', space=sflag, size = 0x4, scoped, tag = 'scoped memory for tpu_custom_call.1']
    #allocation7 [shape = 'u8[131072]{0}', space=vmem, size = 0x20000, scoped, tag = 'input window, operand 3, single buffered']
    #allocation8 [shape = 'u8[393216]{0}', space=vmem, size = 0x60000, scoped, tag = 'input window, operand 5, single buffered']
    #allocation9 [shape = 's32[1]{0}', space=sflag, size = 0x4, scoped, tag = 'scoped memory for tpu_custom_call.1']
    #allocation10 [shape = 'u8[24576]{0}', space=vmem, size = 0x6000, scoped, tag = 'output window, operand 0, single buffered']
    #allocation11 [shape = 'u8[4096]{0}', space=vmem, size = 0x1000, scoped, tag = 'output window, operand 1, single buffered']
    #allocation12 [shape = 's32[1]{0}', space=sflag, size = 0x4, scoped, tag = 'scoped memory for tpu_custom_call.1']
    %14 = vsyncpa [#allocation3], 0
    %15 = vsyncpa [#allocation6], 0
    %16 = vsyncpa [#allocation9], 0
    %17 = vsyncpa [#allocation4], 0
    %18 = vsyncpa [#allocation12], 0
    // Predicated region
    $region2: #{tpu_custom_call.1} parent=1 // pred_check
      _
    $region3: #{tpu_custom_call.1} parent=1 // pred_check_branch
      %20 = sbr.rel (0) target = $region5
    $region4: #{tpu_custom_call.1} parent=1 // pred_region
      %s22 = ssub.s32 1024, 1024
      %23 = vsyncadd [#allocation3], %s22
      %s25 = sshll.u32 [#allocation2], 4
      %s26 = int_to_ptr.vmem [resolvable:$true] %s25
      %28 = dma.hbm_to_vmem [thread:$0]  %s0, 1024, %s26, [#allocation3]
    $region5: #{tpu_custom_call.1} parent=1 // pred_fallthru
      _
    // Predicated region
    $region6: #{tpu_custom_call.1} parent=1 // pred_check
      _
    $region7: #{tpu_custom_call.1} parent=1 // pred_check_branch
      %30 = sbr.rel (0) target = $region9
    $region8: #{tpu_custom_call.1} parent=1 // pred_region
      %s32 = ssub.s32 8192, 8192
      %33 = vsyncadd [#allocation6], %s32
      %s34 = sshll.u32 [#allocation5], 4
      %s35 = int_to_ptr.vmem [resolvable:$true] %s34
      %40 = dma.hbm_to_vmem [thread:$0]  %s1, 8192, %s35, [#allocation6], 64, 64, 4
    $region9: #{tpu_custom_call.1} parent=1 // pred_fallthru
      _
    // Predicated region
    $region10: #{tpu_custom_call.1} parent=1 // pred_check
      _
    $region11: #{tpu_custom_call.1} parent=1 // pred_check_branch
      %42 = sbr.rel (0) target = $region13
    $region12: #{tpu_custom_call.1} parent=1 // pred_region
      _
    $region13: #{tpu_custom_call.1} parent=1 // pred_fallthru
      _
    // Predicated region
    $region14: #{tpu_custom_call.1} parent=1 // pred_check
      _
    $region15: #{tpu_custom_call.1} parent=1 // pred_check_branch
      %44 = sbr.rel (0) target = $region17
    $region16: #{tpu_custom_call.1} parent=1 // pred_region
      %s46 = ssub.s32 4096, 4096
      %47 = vsyncadd [#allocation6], %s46
      %s48 = sshll.u32 [#allocation7], 4
      %s49 = int_to_ptr.vmem [resolvable:$true] %s48
      %54 = dma.hbm_to_vmem [thread:$0]  %s3, 4096, %s49, [#allocation6], 256, 256, 16
    $region17: #{tpu_custom_call.1} parent=1 // pred_fallthru
      _
    // Predicated region
    $region18: #{tpu_custom_call.1} parent=1 // pred_check
      _
    $region19: #{tpu_custom_call.1} parent=1 // pred_check_branch
      %56 = sbr.rel (0) target = $region21
    $region20: #{tpu_custom_call.1} parent=1 // pred_region
      _
    $region21: #{tpu_custom_call.1} parent=1 // pred_fallthru
      _
    // Predicated region
    $region22: #{tpu_custom_call.1} parent=1 // pred_check
      _
    $region23: #{tpu_custom_call.1} parent=1 // pred_check_branch
      %58 = sbr.rel (0) target = $region25
    $region24: #{tpu_custom_call.1} parent=1 // pred_region
      %s60 = ssub.s32 12288, 12288
      %61 = vsyncadd [#allocation9], %s60
      %s62 = sshll.u32 [#allocation8], 4
      %s63 = int_to_ptr.vmem [resolvable:$true] %s62
      %68 = dma.hbm_to_vmem [thread:$0]  %s5, 12288, %s63, [#allocation9], 768, 768, 48
    $region25: #{tpu_custom_call.1} parent=1 // pred_fallthru
      _
    // Predicated region
    $region26: #{tpu_custom_call.1} parent=1 // pred_check
      _
    $region27: #{tpu_custom_call.1} parent=1 // pred_check_branch
      %70 = sbr.rel (0) target = $region29
    $region28: #{tpu_custom_call.1} parent=1 // pred_region
      _
    $region29: #{tpu_custom_call.1} parent=1 // pred_fallthru
      _
    // Predicated region
    $region30: #{tpu_custom_call.1} parent=1 // pred_check
      _
    $region31: #{tpu_custom_call.1} parent=1 // pred_check_branch
      %72 = sbr.rel (0) target = $region33
    $region32: #{tpu_custom_call.1} parent=1 // pred_region
      %73 = dma.done [#allocation3], 1024
    $region33: #{tpu_custom_call.1} parent=1 // pred_fallthru
      _
    // Predicated region
    $region34: #{tpu_custom_call.1} parent=1 // pred_check
      _
    $region35: #{tpu_custom_call.1} parent=1 // pred_check_branch
      %75 = sbr.rel (0) target = $region37
    $region36: #{tpu_custom_call.1} parent=1 // pred_region
      %76 = dma.done [#allocation6], 8192
    $region37: #{tpu_custom_call.1} parent=1 // pred_fallthru
      _
    // Predicated region
    $region38: #{tpu_custom_call.1} parent=1 // pred_check
      _
    $region39: #{tpu_custom_call.1} parent=1 // pred_check_branch
      %78 = sbr.rel (0) target = $region41
    $region40: #{tpu_custom_call.1} parent=1 // pred_region
      %79 = dma.done [#allocation6], 4096
    $region41: #{tpu_custom_call.1} parent=1 // pred_fallthru
      _
    // Predicated region
    $region42: #{tpu_custom_call.1} parent=1 // pred_check
      _
    $region43: #{tpu_custom_call.1} parent=1 // pred_check_branch
      %81 = sbr.rel (0) target = $region45
    $region44: #{tpu_custom_call.1} parent=1 // pred_region
      %82 = dma.done [#allocation9], 12288
    $region45: #{tpu_custom_call.1} parent=1 // pred_fallthru
      _
    %v84 = vld [vmem:[#allocation2] sm:$0xff]
    %v85 = vld [vmem:[#allocation2 + $0x8] sm:$0xff]
    %v86 = vld [vmem:[#allocation2 + $0x10] sm:$0xff]
    %v87 = vld [vmem:[#allocation2 + $0x18] sm:$0xff]
    %v88 = vld [vmem:[#allocation2 + $0x20] sm:$0xff]
    %v89 = vld [vmem:[#allocation2 + $0x28] sm:$0xff]
    %v90 = vld [vmem:[#allocation2 + $0x30] sm:$0xff]
    %v91 = vld [vmem:[#allocation2 + $0x38] sm:$0xff]
    %v92 = vpack.c.bf16 %v84, %v84
    %v93 = vpack.c.bf16 %v85, %v85
    %v94 = vpack.c.bf16 %v86, %v86
    %v95 = vpack.c.bf16 %v87, %v87
    %v96 = vpack.c.bf16 %v88, %v88
    %v97 = vpack.c.bf16 %v89, %v89
    %v98 = vpack.c.bf16 %v90, %v90
    %v99 = vpack.c.bf16 %v91, %v91
    %v100 = vld [vmem:[#allocation5] sm:$0xf]
    %v101 = vld [vmem:[#allocation5 + $0x4] sm:$0xf]
    %v102 = vld [vmem:[#allocation5 + $0x8] sm:$0xf]
    %v103 = vld [vmem:[#allocation5 + $0xc] sm:$0xf]
    %v104 = vld [vmem:[#allocation5 + $0x10] sm:$0xf]
    %v105 = vld [vmem:[#allocation5 + $0x14] sm:$0xf]
    %v106 = vld [vmem:[#allocation5 + $0x18] sm:$0xf]
    %v107 = vld [vmem:[#allocation5 + $0x1c] sm:$0xf]
    %v108 = vld [vmem:[#allocation5 + $0x20] sm:$0xf]
    %v109 = vld [vmem:[#allocation5 + $0x24] sm:$0xf]
    %v110 = vld [vmem:[#allocation5 + $0x28] sm:$0xf]
    %v111 = vld [vmem:[#allocation5 + $0x2c] sm:$0xf]
    %v112 = vld [vmem:[#allocation5 + $0x30] sm:$0xf]
    %v113 = vld [vmem:[#allocation5 + $0x34] sm:$0xf]
    %v114 = vld [vmem:[#allocation5 + $0x38] sm:$0xf]
    %v115 = vld [vmem:[#allocation5 + $0x3c] sm:$0xf]
    %v116 = vld [vmem:[#allocation5 + $0x40] sm:$0xf]
    %v117 = vld [vmem:[#allocation5 + $0x44] sm:$0xf]
    %v118 = vld [vmem:[#allocation5 + $0x48] sm:$0xf]
    %v119 = vld [vmem:[#allocation5 + $0x4c] sm:$0xf]
    %v120 = vld [vmem:[#allocation5 + $0x50] sm:$0xf]
    %v121 = vld [vmem:[#allocation5 + $0x54] sm:$0xf]
    %v122 = vld [vmem:[#allocation5 + $0x58] sm:$0xf]
    %v123 = vld [vmem:[#allocation5 + $0x5c] sm:$0xf]
    %v124 = vld [vmem:[#allocation5 + $0x60] sm:$0xf]
    %v125 = vld [vmem:[#allocation5 + $0x64] sm:$0xf]
    %v126 = vld [vmem:[#allocation5 + $0x68] sm:$0xf]
    %v127 = vld [vmem:[#allocation5 + $0x6c] sm:$0xf]
    %v128 = vld [vmem:[#allocation5 + $0x70] sm:$0xf]
    %v129 = vld [vmem:[#allocation5 + $0x74] sm:$0xf]
    %v130 = vld [vmem:[#allocation5 + $0x78] sm:$0xf]
    %v131 = vld [vmem:[#allocation5 + $0x7c] sm:$0xf]
    %v132 = vld [vmem:[#allocation5 + $0x80] sm:$0xf]
    %v133 = vld [vmem:[#allocation5 + $0x84] sm:$0xf]
    %v134 = vld [vmem:[#allocation5 + $0x88] sm:$0xf]
    %v135 = vld [vmem:[#allocation5 + $0x8c] sm:$0xf]
    %v136 = vld [vmem:[#allocation5 + $0x90] sm:$0xf]
    %v137 = vld [vmem:[#allocation5 + $0x94] sm:$0xf]
    %v138 = vld [vmem:[#allocation5 + $0x98] sm:$0xf]
    %v139 = vld [vmem:[#allocation5 + $0x9c] sm:$0xf]
    %v140 = vld [vmem:[#allocation5 + $0xa0] sm:$0xf]
    %v141 = vld [vmem:[#allocation5 + $0xa4] sm:$0xf]
    %v142 = vld [vmem:[#allocation5 + $0xa8] sm:$0xf]
    %v143 = vld [vmem:[#allocation5 + $0xac] sm:$0xf]
    %v144 = vld [vmem:[#allocation5 + $0xb0] sm:$0xf]
    %v145 = vld [vmem:[#allocation5 + $0xb4] sm:$0xf]
    %v146 = vld [vmem:[#allocation5 + $0xb8] sm:$0xf]
    %v147 = vld [vmem:[#allocation5 + $0xbc] sm:$0xf]
    %v148 = vld [vmem:[#allocation5 + $0xc0] sm:$0xf]
    %v149 = vld [vmem:[#allocation5 + $0xc4] sm:$0xf]
    %v150 = vld [vmem:[#allocation5 + $0xc8] sm:$0xf]
    %v151 = vld [vmem:[#allocation5 + $0xcc] sm:$0xf]
    %v152 = vld [vmem:[#allocation5 + $0xd0] sm:$0xf]
    %v153 = vld [vmem:[#allocation5 + $0xd4] sm:$0xf]
    %v154 = vld [vmem:[#allocation5 + $0xd8] sm:$0xf]
    %v155 = vld [vmem:[#allocation5 + $0xdc] sm:$0xf]
    %v156 = vld [vmem:[#allocation5 + $0xe0] sm:$0xf]
    %v157 = vld [vmem:[#allocation5 + $0xe4] sm:$0xf]
    %v158 = vld [vmem:[#allocation5 + $0xe8] sm:$0xf]
    %v159 = vld [vmem:[#allocation5 + $0xec] sm:$0xf]
    %v160 = vld [vmem:[#allocation5 + $0xf0] sm:$0xf]
    %v161 = vld [vmem:[#allocation5 + $0xf4] sm:$0xf]
    %v162 = vld [vmem:[#allocation5 + $0xf8] sm:$0xf]
    %v163 = vld [vmem:[#allocation5 + $0xfc] sm:$0xf]
    %v164 = vld [vmem:[#allocation5 + $0x100] sm:$0xf]
    %v165 = vld [vmem:[#allocation5 + $0x104] sm:$0xf]
    %v166 = vld [vmem:[#allocation5 + $0x108] sm:$0xf]
    %v167 = vld [vmem:[#allocation5 + $0x10c] sm:$0xf]
    %v168 = vld [vmem:[#allocation5 + $0x110] sm:$0xf]
    %v169 = vld [vmem:[#allocation5 + $0x114] sm:$0xf]
    %v170 = vld [vmem:[#allocation5 + $0x118] sm:$0xf]
    %v171 = vld [vmem:[#allocation5 + $0x11c] sm:$0xf]
    %v172 = vld [vmem:[#allocation5 + $0x120] sm:$0xf]
    %v173 = vld [vmem:[#allocation5 + $0x124] sm:$0xf]
    %v174 = vld [vmem:[#allocation5 + $0x128] sm:$0xf]
    %v175 = vld [vmem:[#allocation5 + $0x12c] sm:$0xf]
    %v176 = vld [vmem:[#allocation5 + $0x130] sm:$0xf]
    %v177 = vld [vmem:[#allocation5 + $0x134] sm:$0xf]
    %v178 = vld [vmem:[#allocation5 + $0x138] sm:$0xf]
    %v179 = vld [vmem:[#allocation5 + $0x13c] sm:$0xf]
    %v180 = vld [vmem:[#allocation5 + $0x140] sm:$0xf]
    %v181 = vld [vmem:[#allocation5 + $0x144] sm:$0xf]
    %v182 = vld [vmem:[#allocation5 + $0x148] sm:$0xf]
    %v183 = vld [vmem:[#allocation5 + $0x14c] sm:$0xf]
    %v184 = vld [vmem:[#allocation5 + $0x150] sm:$0xf]
    %v185 = vld [vmem:[#allocation5 + $0x154] sm:$0xf]
    %v186 = vld [vmem:[#allocation5 + $0x158] sm:$0xf]
    %v187 = vld [vmem:[#allocation5 + $0x15c] sm:$0xf]
    %v188 = vld [vmem:[#allocation5 + $0x160] sm:$0xf]
    %v189 = vld [vmem:[#allocation5 + $0x164] sm:$0xf]
    %v190 = vld [vmem:[#allocation5 + $0x168] sm:$0xf]
    %v191 = vld [vmem:[#allocation5 + $0x16c] sm:$0xf]
    %v192 = vld [vmem:[#allocation5 + $0x170] sm:$0xf]
    %v193 = vld [vmem:[#allocation5 + $0x174] sm:$0xf]
    %v194 = vld [vmem:[#allocation5 + $0x178] sm:$0xf]
    %v195 = vld [vmem:[#allocation5 + $0x17c] sm:$0xf]
    %v196 = vld [vmem:[#allocation5 + $0x180] sm:$0xf]
    %v197 = vld [vmem:[#allocation5 + $0x184] sm:$0xf]
    %v198 = vld [vmem:[#allocation5 + $0x188] sm:$0xf]
    %v199 = vld [vmem:[#allocation5 + $0x18c] sm:$0xf]
    %v200 = vld [vmem:[#allocation5 + $0x190] sm:$0xf]
    %v201 = vld [vmem:[#allocation5 + $0x194] sm:$0xf]
    %v202 = vld [vmem:[#allocation5 + $0x198] sm:$0xf]
    %v203 = vld [vmem:[#allocation5 + $0x19c] sm:$0xf]
    %v204 = vld [vmem:[#allocation5 + $0x1a0] sm:$0xf]
    %v205 = vld [vmem:[#allocation5 + $0x1a4] sm:$0xf]
    %v206 = vld [vmem:[#allocation5 + $0x1a8] sm:$0xf]
    %v207 = vld [vmem:[#allocation5 + $0x1ac] sm:$0xf]
    %v208 = vld [vmem:[#allocation5 + $0x1b0] sm:$0xf]
    %v209 = vld [vmem:[#allocation5 + $0x1b4] sm:$0xf]
    %v210 = vld [vmem:[#allocation5 + $0x1b8] sm:$0xf]
    %v211 = vld [vmem:[#allocation5 + $0x1bc] sm:$0xf]
    %v212 = vld [vmem:[#allocation5 + $0x1c0] sm:$0xf]
    %v213 = vld [vmem:[#allocation5 + $0x1c4] sm:$0xf]
    %v214 = vld [vmem:[#allocation5 + $0x1c8] sm:$0xf]
    %v215 = vld [vmem:[#allocation5 + $0x1cc] sm:$0xf]
    %v216 = vld [vmem:[#allocation5 + $0x1d0] sm:$0xf]
    %v217 = vld [vmem:[#allocation5 + $0x1d4] sm:$0xf]
    %v218 = vld [vmem:[#allocation5 + $0x1d8] sm:$0xf]
    %v219 = vld [vmem:[#allocation5 + $0x1dc] sm:$0xf]
    %v220 = vld [vmem:[#allocation5 + $0x1e0] sm:$0xf]
    %v221 = vld [vmem:[#allocation5 + $0x1e4] sm:$0xf]
    %v222 = vld [vmem:[#allocation5 + $0x1e8] sm:$0xf]
    %v223 = vld [vmem:[#allocation5 + $0x1ec] sm:$0xf]
    %v224 = vld [vmem:[#allocation5 + $0x1f0] sm:$0xf]
    %v225 = vld [vmem:[#allocation5 + $0x1f4] sm:$0xf]
    %v226 = vld [vmem:[#allocation5 + $0x1f8] sm:$0xf]
    %v227 = vld [vmem:[#allocation5 + $0x1fc] sm:$0xf]
    %v228 = vld [vmem:[%s2] sm:$0x1]
    %v230 = vlaneseq
    %v231 = vshrl.u32 %v230, 7
    %v232 = vsub.s32 0, %v231
    %v233 = vrot.slane %v228, %v232
    %v363 = vunpack.c.l.b16 %v100
    %v364 = vunpack.c.l.b16 %v101
    %v365 = vunpack.c.l.b16 %v102
    %v366 = vunpack.c.l.b16 %v103
    %v367 = vunpack.c.l.b16 %v104
    %v368 = vunpack.c.l.b16 %v105
    %v369 = vunpack.c.l.b16 %v106
    %v370 = vunpack.c.l.b16 %v107
    %v371 = vunpack.c.l.b16 %v108
    %v372 = vunpack.c.l.b16 %v109
    %v373 = vunpack.c.l.b16 %v110
    %v374 = vunpack.c.l.b16 %v111
    %v375 = vunpack.c.l.b16 %v112
    %v376 = vunpack.c.l.b16 %v113
    %v377 = vunpack.c.l.b16 %v114
    %v378 = vunpack.c.l.b16 %v115
    %v379 = vunpack.c.l.b16 %v116
    %v380 = vunpack.c.l.b16 %v117
    %v381 = vunpack.c.l.b16 %v118
    %v382 = vunpack.c.l.b16 %v119
    %v383 = vunpack.c.l.b16 %v120
    %v384 = vunpack.c.l.b16 %v121
    %v385 = vunpack.c.l.b16 %v122
    %v386 = vunpack.c.l.b16 %v123
    %v387 = vunpack.c.l.b16 %v124
    %v388 = vunpack.c.l.b16 %v125
    %v389 = vunpack.c.l.b16 %v126
    %v390 = vunpack.c.l.b16 %v127
    %v391 = vunpack.c.l.b16 %v128
    %v392 = vunpack.c.l.b16 %v129
    %v393 = vunpack.c.l.b16 %v130
    %v394 = vunpack.c.l.b16 %v131
    %v395 = vunpack.c.l.b16 %v132
    %v396 = vunpack.c.l.b16 %v133
    %v397 = vunpack.c.l.b16 %v134
    %v398 = vunpack.c.l.b16 %v135
    %v399 = vunpack.c.l.b16 %v136
    %v400 = vunpack.c.l.b16 %v137
    %v401 = vunpack.c.l.b16 %v138
    %v402 = vunpack.c.l.b16 %v139
    %v403 = vunpack.c.l.b16 %v140
    %v404 = vunpack.c.l.b16 %v141
    %v405 = vunpack.c.l.b16 %v142
    %v406 = vunpack.c.l.b16 %v143
    %v407 = vunpack.c.l.b16 %v144
    %v408 = vunpack.c.l.b16 %v145
    %v409 = vunpack.c.l.b16 %v146
    %v410 = vunpack.c.l.b16 %v147
    %v411 = vunpack.c.l.b16 %v148
    %v412 = vunpack.c.l.b16 %v149
    %v413 = vunpack.c.l.b16 %v150
    %v414 = vunpack.c.l.b16 %v151
    %v415 = vunpack.c.l.b16 %v152
    %v416 = vunpack.c.l.b16 %v153
    %v417 = vunpack.c.l.b16 %v154
    %v418 = vunpack.c.l.b16 %v155
    %v419 = vunpack.c.l.b16 %v156
    %v420 = vunpack.c.l.b16 %v157
    %v421 = vunpack.c.l.b16 %v158
    %v422 = vunpack.c.l.b16 %v159
    %v423 = vunpack.c.l.b16 %v160
    %v424 = vunpack.c.l.b16 %v161
    %v425 = vunpack.c.l.b16 %v162
    %v426 = vunpack.c.l.b16 %v163
    %v427 = vunpack.c.l.b16 %v164
    %v428 = vunpack.c.l.b16 %v165
    %v429 = vunpack.c.l.b16 %v166
    %v430 = vunpack.c.l.b16 %v167
    %v431 = vunpack.c.l.b16 %v168
    %v432 = vunpack.c.l.b16 %v169
    %v433 = vunpack.c.l.b16 %v170
    %v434 = vunpack.c.l.b16 %v171
    %v435 = vunpack.c.l.b16 %v172
    %v436 = vunpack.c.l.b16 %v173
    %v437 = vunpack.c.l.b16 %v174
    %v438 = vunpack.c.l.b16 %v175
    %v439 = vunpack.c.l.b16 %v176
    %v440 = vunpack.c.l.b16 %v177
    %v441 = vunpack.c.l.b16 %v178
    %v442 = vunpack.c.l.b16 %v179
    %v443 = vunpack.c.l.b16 %v180
    %v444 = vunpack.c.l.b16 %v181
    %v445 = vunpack.c.l.b16 %v182
    %v446 = vunpack.c.l.b16 %v183
    %v447 = vunpack.c.l.b16 %v184
    %v448 = vunpack.c.l.b16 %v185
    %v449 = vunpack.c.l.b16 %v186
    %v450 = vunpack.c.l.b16 %v187
    %v451 = vunpack.c.l.b16 %v188
    %v452 = vunpack.c.l.b16 %v189
    %v453 = vunpack.c.l.b16 %v190
    %v454 = vunpack.c.l.b16 %v191
    %v455 = vunpack.c.l.b16 %v192
    %v456 = vunpack.c.l.b16 %v193
    %v457 = vunpack.c.l.b16 %v194
    %v458 = vunpack.c.l.b16 %v195
    %v459 = vunpack.c.l.b16 %v196
    %v460 = vunpack.c.l.b16 %v197
    %v461 = vunpack.c.l.b16 %v198
    %v462 = vunpack.c.l.b16 %v199
    %v463 = vunpack.c.l.b16 %v200
    %v464 = vunpack.c.l.b16 %v201
    %v465 = vunpack.c.l.b16 %v202
    %v466 = vunpack.c.l.b16 %v203
    %v467 = vunpack.c.l.b16 %v204
    %v468 = vunpack.c.l.b16 %v205
    %v469 = vunpack.c.l.b16 %v206
    %v470 = vunpack.c.l.b16 %v207
    %v471 = vunpack.c.l.b16 %v208
    %v472 = vunpack.c.l.b16 %v209
    %v473 = vunpack.c.l.b16 %v210
    %v474 = vunpack.c.l.b16 %v211
    %v475 = vunpack.c.l.b16 %v212
    %v476 = vunpack.c.l.b16 %v213
    %v477 = vunpack.c.l.b16 %v214
    %v478 = vunpack.c.l.b16 %v215
    %v479 = vunpack.c.l.b16 %v216
    %v480 = vunpack.c.l.b16 %v217
    %v481 = vunpack.c.l.b16 %v218
    %v482 = vunpack.c.l.b16 %v219
    %v483 = vunpack.c.l.b16 %v220
    %v484 = vunpack.c.l.b16 %v221
    %v485 = vunpack.c.l.b16 %v222
    %v486 = vunpack.c.l.b16 %v223
    %v487 = vunpack.c.l.b16 %v224
    %v488 = vunpack.c.l.b16 %v225
    %v489 = vunpack.c.l.b16 %v226
    %v490 = vunpack.c.l.b16 %v227
    %v491 = vpack.c.b16 %v364, %v363
    %v492 = vpack.c.b16 %v366, %v365
    %v493 = vpack.c.b16 %v368, %v367
    %v494 = vpack.c.b16 %v370, %v369
    %v495 = vpack.c.b16 %v372, %v371
    %v496 = vpack.c.b16 %v374, %v373
    %v497 = vpack.c.b16 %v376, %v375
    %v498 = vpack.c.b16 %v378, %v377
    %v499 = vpack.c.b16 %v380, %v379
    %v500 = vpack.c.b16 %v382, %v381
    %v501 = vpack.c.b16 %v384, %v383
    %v502 = vpack.c.b16 %v386, %v385
    %v503 = vpack.c.b16 %v388, %v387
    %v504 = vpack.c.b16 %v390, %v389
    %v505 = vpack.c.b16 %v392, %v391
    %v506 = vpack.c.b16 %v394, %v393
    %v507 = vpack.c.b16 %v396, %v395
    %v508 = vpack.c.b16 %v398, %v397
    %v509 = vpack.c.b16 %v400, %v399
    %v510 = vpack.c.b16 %v402, %v401
    %v511 = vpack.c.b16 %v404, %v403
    %v512 = vpack.c.b16 %v406, %v405
    %v513 = vpack.c.b16 %v408, %v407
    %v514 = vpack.c.b16 %v410, %v409
    %v515 = vpack.c.b16 %v412, %v411
    %v516 = vpack.c.b16 %v414, %v413
    %v517 = vpack.c.b16 %v416, %v415
    %v518 = vpack.c.b16 %v418, %v417
    %v519 = vpack.c.b16 %v420, %v419
    %v520 = vpack.c.b16 %v422, %v421
    %v521 = vpack.c.b16 %v424, %v423
    %v522 = vpack.c.b16 %v426, %v425
    %v523 = vpack.c.b16 %v428, %v427
    %v524 = vpack.c.b16 %v430, %v429
    %v525 = vpack.c.b16 %v432, %v431
    %v526 = vpack.c.b16 %v434, %v433
    %v527 = vpack.c.b16 %v436, %v435
    %v528 = vpack.c.b16 %v438, %v437
    %v529 = vpack.c.b16 %v440, %v439
    %v530 = vpack.c.b16 %v442, %v441
    %v531 = vpack.c.b16 %v444, %v443
    %v532 = vpack.c.b16 %v446, %v445
    %v533 = vpack.c.b16 %v448, %v447
    %v534 = vpack.c.b16 %v450, %v449
    %v535 = vpack.c.b16 %v452, %v451
    %v536 = vpack.c.b16 %v454, %v453
    %v537 = vpack.c.b16 %v456, %v455
    %v538 = vpack.c.b16 %v458, %v457
    %v539 = vpack.c.b16 %v460, %v459
    %v540 = vpack.c.b16 %v462, %v461
    %v541 = vpack.c.b16 %v464, %v463
    %v542 = vpack.c.b16 %v466, %v465
    %v543 = vpack.c.b16 %v468, %v467
    %v544 = vpack.c.b16 %v470, %v469
    %v545 = vpack.c.b16 %v472, %v471
    %v546 = vpack.c.b16 %v474, %v473
    %v547 = vpack.c.b16 %v476, %v475
    %v548 = vpack.c.b16 %v478, %v477
    %v549 = vpack.c.b16 %v480, %v479
    %v550 = vpack.c.b16 %v482, %v481
    %v551 = vpack.c.b16 %v484, %v483
    %v552 = vpack.c.b16 %v486, %v485
    %v553 = vpack.c.b16 %v488, %v487
    %v554 = vpack.c.b16 %v490, %v489
    %619 = vmatprep.subr.bf16.mxu0 0
    %620 = vmatpush1.bf16.msra.mxu0 %v491
    %621 = vmatprep.subr.bf16.mxu0 0
    %622 = vmatpush1.bf16.msra.mxu0 %v492
    %623 = vmatprep.subr.bf16.mxu0 0
    %624 = vmatpush1.bf16.msra.mxu0 %v493
    %625 = vmatprep.subr.bf16.mxu0 0
    %626 = vmatpush1.bf16.msra.mxu0 %v494
    %627 = vmatprep.subr.bf16.mxu0 0
    %628 = vmatpush1.bf16.msra.mxu0 %v495
    %629 = vmatprep.subr.bf16.mxu0 0
    %630 = vmatpush1.bf16.msra.mxu0 %v496
    %631 = vmatprep.subr.bf16.mxu0 0
    %632 = vmatpush1.bf16.msra.mxu0 %v497
    %633 = vmatprep.subr.bf16.mxu0 0
    %634 = vmatpush1.bf16.msra.mxu0 %v498
    %635 = vmatprep.subr.bf16.mxu0 0
    %636 = vmatpush1.bf16.msra.mxu0 %v499
    %637 = vmatprep.subr.bf16.mxu0 0
    %638 = vmatpush1.bf16.msra.mxu0 %v500
    %639 = vmatprep.subr.bf16.mxu0 0
    %640 = vmatpush1.bf16.msra.mxu0 %v501
    %641 = vmatprep.subr.bf16.mxu0 0
    %642 = vmatpush1.bf16.msra.mxu0 %v502
    %643 = vmatprep.subr.bf16.mxu0 0
    %644 = vmatpush1.bf16.msra.mxu0 %v503
    %645 = vmatprep.subr.bf16.mxu0 0
    %646 = vmatpush1.bf16.msra.mxu0 %v504
    %647 = vmatprep.subr.bf16.mxu0 0
    %648 = vmatpush1.bf16.msra.mxu0 %v505
    %649 = vmatprep.subr.bf16.mxu0 0
    %650 = vmatpush1.bf16.msra.mxu0 %v506
    %651 = vmatprep.mubr.bf16.mxu0 %v93
    %652 = vmatmul.mubr.bf16.gmra.mrb[0].mxu0 %v92
    %v653 = vpop.f32.mrb[0].mxu0
    %v654 = vadd.f32 %v233, %v653
    %v655 = vpop.f32.mrb[0].mxu0
    %v656 = vpop.f32.mrb[0].mxu0
    %v657 = vpop.f32.mrb[0].mxu0
    %658 = vdwg.mxu0
    %659 = vmatprep.subr.bf16.mxu0 0
    %660 = vmatpush1.bf16.msra.mxu0 %v507
    %661 = vmatprep.subr.bf16.mxu0 0
    %662 = vmatpush1.bf16.msra.mxu0 %v508
    %663 = vmatprep.subr.bf16.mxu0 0
    %664 = vmatpush1.bf16.msra.mxu0 %v509
    %665 = vmatprep.subr.bf16.mxu0 0
    %666 = vmatpush1.bf16.msra.mxu0 %v510
    %667 = vmatprep.subr.bf16.mxu0 0
    %668 = vmatpush1.bf16.msra.mxu0 %v511
    %669 = vmatprep.subr.bf16.mxu0 0
    %670 = vmatpush1.bf16.msra.mxu0 %v512
    %671 = vmatprep.subr.bf16.mxu0 0
    %672 = vmatpush1.bf16.msra.mxu0 %v513
    %673 = vmatprep.subr.bf16.mxu0 0
    %674 = vmatpush1.bf16.msra.mxu0 %v514
    %675 = vmatprep.subr.bf16.mxu0 0
    %676 = vmatpush1.bf16.msra.mxu0 %v515
    %677 = vmatprep.subr.bf16.mxu0 0
    %678 = vmatpush1.bf16.msra.mxu0 %v516
    %679 = vmatprep.subr.bf16.mxu0 0
    %680 = vmatpush1.bf16.msra.mxu0 %v517
    %681 = vmatprep.subr.bf16.mxu0 0
    %682 = vmatpush1.bf16.msra.mxu0 %v518
    %683 = vmatprep.subr.bf16.mxu0 0
    %684 = vmatpush1.bf16.msra.mxu0 %v519
    %685 = vmatprep.subr.bf16.mxu0 0
    %686 = vmatpush1.bf16.msra.mxu0 %v520
    %687 = vmatprep.subr.bf16.mxu0 0
    %688 = vmatpush1.bf16.msra.mxu0 %v521
    %689 = vmatprep.subr.bf16.mxu0 0
    %690 = vmatpush1.bf16.msra.mxu0 %v522
    %691 = vmatprep.mubr.bf16.mxu0 %v95
    %692 = vmatmul.mubr.bf16.gmra.mrb[0].mxu0 %v94
    %v693 = vpop.f32.mrb[0].mxu0
    %v694 = vadd.f32 %v654, %v693
    %v695 = vpop.f32.mrb[0].mxu0
    %v696 = vpop.f32.mrb[0].mxu0
    %v697 = vpop.f32.mrb[0].mxu0
    %698 = vdwg.mxu0
    %699 = vmatprep.subr.bf16.mxu0 0
    %700 = vmatpush1.bf16.msra.mxu0 %v523
    %701 = vmatprep.subr.bf16.mxu0 0
    %702 = vmatpush1.bf16.msra.mxu0 %v524
    %703 = vmatprep.subr.bf16.mxu0 0
    %704 = vmatpush1.bf16.msra.mxu0 %v525
    %705 = vmatprep.subr.bf16.mxu0 0
    %706 = vmatpush1.bf16.msra.mxu0 %v526
    %707 = vmatprep.subr.bf16.mxu0 0
    %708 = vmatpush1.bf16.msra.mxu0 %v527
    %709 = vmatprep.subr.bf16.mxu0 0
    %710 = vmatpush1.bf16.msra.mxu0 %v528
    %711 = vmatprep.subr.bf16.mxu0 0
    %712 = vmatpush1.bf16.msra.mxu0 %v529
    %713 = vmatprep.subr.bf16.mxu0 0
    %714 = vmatpush1.bf16.msra.mxu0 %v530
    %715 = vmatprep.subr.bf16.mxu0 0
    %716 = vmatpush1.bf16.msra.mxu0 %v531
    %717 = vmatprep.subr.bf16.mxu0 0
    %718 = vmatpush1.bf16.msra.mxu0 %v532
    %719 = vmatprep.subr.bf16.mxu0 0
    %720 = vmatpush1.bf16.msra.mxu0 %v533
    %721 = vmatprep.subr.bf16.mxu0 0
    %722 = vmatpush1.bf16.msra.mxu0 %v534
    %723 = vmatprep.subr.bf16.mxu0 0
    %724 = vmatpush1.bf16.msra.mxu0 %v535
    %725 = vmatprep.subr.bf16.mxu0 0
    %726 = vmatpush1.bf16.msra.mxu0 %v536
    %727 = vmatprep.subr.bf16.mxu0 0
    %728 = vmatpush1.bf16.msra.mxu0 %v537
    %729 = vmatprep.subr.bf16.mxu0 0
    %730 = vmatpush1.bf16.msra.mxu0 %v538
    %731 = vmatprep.mubr.bf16.mxu0 %v97
    %732 = vmatmul.mubr.bf16.gmra.mrb[0].mxu0 %v96
    %v733 = vpop.f32.mrb[0].mxu0
    %v734 = vadd.f32 %v694, %v733
    %v735 = vpop.f32.mrb[0].mxu0
    %v736 = vpop.f32.mrb[0].mxu0
    %v737 = vpop.f32.mrb[0].mxu0
    %738 = vdwg.mxu0
    %739 = vmatprep.subr.bf16.mxu0 0
    %740 = vmatpush1.bf16.msra.mxu0 %v539
    %741 = vmatprep.subr.bf16.mxu0 0
    %742 = vmatpush1.bf16.msra.mxu0 %v540
    %743 = vmatprep.subr.bf16.mxu0 0
    %744 = vmatpush1.bf16.msra.mxu0 %v541
    %745 = vmatprep.subr.bf16.mxu0 0
    %746 = vmatpush1.bf16.msra.mxu0 %v542
    %747 = vmatprep.subr.bf16.mxu0 0
    %748 = vmatpush1.bf16.msra.mxu0 %v543
    %749 = vmatprep.subr.bf16.mxu0 0
    %750 = vmatpush1.bf16.msra.mxu0 %v544
    %751 = vmatprep.subr.bf16.mxu0 0
    %752 = vmatpush1.bf16.msra.mxu0 %v545
    %753 = vmatprep.subr.bf16.mxu0 0
    %754 = vmatpush1.bf16.msra.mxu0 %v546
    %755 = vmatprep.subr.bf16.mxu0 0
    %756 = vmatpush1.bf16.msra.mxu0 %v547
    %757 = vmatprep.subr.bf16.mxu0 0
    %758 = vmatpush1.bf16.msra.mxu0 %v548
    %759 = vmatprep.subr.bf16.mxu0 0
    %760 = vmatpush1.bf16.msra.mxu0 %v549
    %761 = vmatprep.subr.bf16.mxu0 0
    %762 = vmatpush1.bf16.msra.mxu0 %v550
    %763 = vmatprep.subr.bf16.mxu0 0
    %764 = vmatpush1.bf16.msra.mxu0 %v551
    %765 = vmatprep.subr.bf16.mxu0 0
    %766 = vmatpush1.bf16.msra.mxu0 %v552
    %767 = vmatprep.subr.bf16.mxu0 0
    %768 = vmatpush1.bf16.msra.mxu0 %v553
    %769 = vmatprep.subr.bf16.mxu0 0
    %770 = vmatpush1.bf16.msra.mxu0 %v554
    %771 = vmatprep.mubr.bf16.mxu0 %v99
    %772 = vmatmul.mubr.bf16.gmra.mrb[0].mxu0 %v98
    %v773 = vpop.f32.mrb[0].mxu0
    %v774 = vadd.f32 %v734, %v773
    %v775 = vpop.f32.mrb[0].mxu0
    %v776 = vpop.f32.mrb[0].mxu0
    %v777 = vpop.f32.mrb[0].mxu0
    %778 = vdwg.mxu0
    %v779 = vld [vmem:[#allocation7] sm:$0xff]
    %v780 = vld [vmem:[#allocation7 + $0x8] sm:$0xff]
    %v781 = vld [vmem:[#allocation7 + $0x10] sm:$0xff]
    %v782 = vld [vmem:[#allocation7 + $0x18] sm:$0xff]
    %v783 = vld [vmem:[#allocation7 + $0x20] sm:$0xff]
    %v784 = vld [vmem:[#allocation7 + $0x28] sm:$0xff]
    %v785 = vld [vmem:[#allocation7 + $0x30] sm:$0xff]
    %v786 = vld [vmem:[#allocation7 + $0x38] sm:$0xff]
    %v787 = vld [vmem:[#allocation7 + $0x40] sm:$0xff]
    %v788 = vld [vmem:[#allocation7 + $0x48] sm:$0xff]
    %v789 = vld [vmem:[#allocation7 + $0x50] sm:$0xff]
    %v790 = vld [vmem:[#allocation7 + $0x58] sm:$0xff]
    %v791 = vld [vmem:[#allocation7 + $0x60] sm:$0xff]
    %v792 = vld [vmem:[#allocation7 + $0x68] sm:$0xff]
    %v793 = vld [vmem:[#allocation7 + $0x70] sm:$0xff]
    %v794 = vld [vmem:[#allocation7 + $0x78] sm:$0xff]
    %v795 = vld [vmem:[#allocation7 + $0x80] sm:$0xff]
    %v796 = vld [vmem:[#allocation7 + $0x88] sm:$0xff]
    %v797 = vld [vmem:[#allocation7 + $0x90] sm:$0xff]
    %v798 = vld [vmem:[#allocation7 + $0x98] sm:$0xff]
    %v799 = vld [vmem:[#allocation7 + $0xa0] sm:$0xff]
    %v800 = vld [vmem:[#allocation7 + $0xa8] sm:$0xff]
    %v801 = vld [vmem:[#allocation7 + $0xb0] sm:$0xff]
    %v802 = vld [vmem:[#allocation7 + $0xb8] sm:$0xff]
    %v803 = vld [vmem:[#allocation7 + $0xc0] sm:$0xff]
    %v804 = vld [vmem:[#allocation7 + $0xc8] sm:$0xff]
    %v805 = vld [vmem:[#allocation7 + $0xd0] sm:$0xff]
    %v806 = vld [vmem:[#allocation7 + $0xd8] sm:$0xff]
    %v807 = vld [vmem:[#allocation7 + $0xe0] sm:$0xff]
    %v808 = vld [vmem:[#allocation7 + $0xe8] sm:$0xff]
    %v809 = vld [vmem:[#allocation7 + $0xf0] sm:$0xff]
    %v810 = vld [vmem:[#allocation7 + $0xf8] sm:$0xff]
    %v811 = vld [vmem:[%s4] sm:$0x3]
    %v813 = vlaneseq
    %v814 = vshrl.u32 %v813, 7
    %v815 = vsub.s32 0, %v814
    %v816 = vrot.slane %v811, %v815
    %v817 = vlaneseq
    %v818 = vshrl.u32 %v817, 7
    %v819 = vsub.s32 1, %v818
    %v820 = vrot.slane %v811, %v819
    %823 = vmatprep.subr.mxu0 %v780
    %824 = vmatpush1.msra.mxu0 %v779
    %825 = vmatprep.subr.mxu0 %v782
    %826 = vmatpush1.msra.mxu0 %v781
    %827 = vmatprep.subr.mxu0 %v784
    %828 = vmatpush1.msra.mxu0 %v783
    %829 = vmatprep.subr.mxu0 %v786
    %830 = vmatpush1.msra.mxu0 %v785
    %831 = vmatprep.subr.mxu0 %v788
    %832 = vmatpush1.msra.mxu0 %v787
    %833 = vmatprep.subr.mxu0 %v790
    %834 = vmatpush1.msra.mxu0 %v789
    %835 = vmatprep.subr.mxu0 %v792
    %836 = vmatpush1.msra.mxu0 %v791
    %837 = vmatprep.subr.mxu0 %v794
    %838 = vmatpush1.msra.mxu0 %v793
    %839 = vmatprep.subr.mxu0 %v796
    %840 = vmatpush1.msra.mxu0 %v795
    %841 = vmatprep.subr.mxu0 %v798
    %842 = vmatpush1.msra.mxu0 %v797
    %843 = vmatprep.subr.mxu0 %v800
    %844 = vmatpush1.msra.mxu0 %v799
    %845 = vmatprep.subr.mxu0 %v802
    %846 = vmatpush1.msra.mxu0 %v801
    %847 = vmatprep.subr.mxu0 %v804
    %848 = vmatpush1.msra.mxu0 %v803
    %849 = vmatprep.subr.mxu0 %v806
    %850 = vmatpush1.msra.mxu0 %v805
    %851 = vmatprep.subr.mxu0 %v808
    %852 = vmatpush1.msra.mxu0 %v807
    %853 = vmatprep.subr.mxu0 %v810
    %854 = vmatpush1.msra.mxu0 %v809
    %855 = vmatprep.subr.mxu0 0.0
    %856 = vmatpush1.msra.mxu0 0.0
    %857 = vmatprep.subr.mxu0 0.0
    %858 = vmatpush1.msra.mxu0 0.0
    %859 = vmatprep.subr.mxu0 0.0
    %860 = vmatpush1.msra.mxu0 0.0
    %861 = vmatprep.subr.mxu0 0.0
    %862 = vmatpush1.msra.mxu0 0.0
    %863 = vmatprep.subr.mxu0 0.0
    %864 = vmatpush1.msra.mxu0 0.0
    %865 = vmatprep.subr.mxu0 0.0
    %866 = vmatpush1.msra.mxu0 0.0
    %867 = vmatprep.subr.mxu0 0.0
    %868 = vmatpush1.msra.mxu0 0.0
    %869 = vmatprep.subr.mxu0 0.0
    %870 = vmatpush1.msra.mxu0 0.0
    %871 = vmatprep.subr.mxu0 0.0
    %872 = vmatpush1.msra.mxu0 0.0
    %873 = vmatprep.subr.mxu0 0.0
    %874 = vmatpush1.msra.mxu0 0.0
    %875 = vmatprep.subr.mxu0 0.0
    %876 = vmatpush1.msra.mxu0 0.0
    %877 = vmatprep.subr.mxu0 0.0
    %878 = vmatpush1.msra.mxu0 0.0
    %879 = vmatprep.subr.mxu0 0.0
    %880 = vmatpush1.msra.mxu0 0.0
    %881 = vmatprep.subr.mxu0 0.0
    %882 = vmatpush1.msra.mxu0 0.0
    %883 = vmatprep.subr.mxu0 0.0
    %884 = vmatpush1.msra.mxu0 0.0
    %885 = vmatprep.subr.mxu0 0.0
    %886 = vmatpush1.msra.mxu0 0.0
    %887 = vmatprep.mubr.f32.mxu0 0.0
    %888 = vmatmul.mubr.f32.gmra.mrb[0].mxu0 %v774
    %v889 = vpop.f32.mrb[0].mxu0
    %v890 = vadd.f32 %v816, %v889
    %v891 = vpop.f32.mrb[0].mxu0
    %v892 = vadd.f32 %v820, %v891
    %893 = vdwg.mxu0
    %v894 = vmax.f32 %v890, 0.0
    %v895 = vld [vmem:[#allocation8] sm:$0xff]
    %v896 = vld [vmem:[#allocation8 + $0x8] sm:$0xff]
    %v897 = vld [vmem:[#allocation8 + $0x10] sm:$0xff]
    %v898 = vld [vmem:[#allocation8 + $0x18] sm:$0xff]
    %v899 = vld [vmem:[#allocation8 + $0x20] sm:$0xff]
    %v900 = vld [vmem:[#allocation8 + $0x28] sm:$0xff]
    %v901 = vld [vmem:[#allocation8 + $0x30] sm:$0xff]
    %v902 = vld [vmem:[#allocation8 + $0x38] sm:$0xff]
    %v903 = vld [vmem:[#allocation8 + $0x40] sm:$0xff]
    %v904 = vld [vmem:[#allocation8 + $0x48] sm:$0xff]
    %v905 = vld [vmem:[#allocation8 + $0x50] sm:$0xff]
    %v906 = vld [vmem:[#allocation8 + $0x58] sm:$0xff]
    %v907 = vld [vmem:[#allocation8 + $0x60] sm:$0xff]
    %v908 = vld [vmem:[#allocation8 + $0x68] sm:$0xff]
    %v909 = vld [vmem:[#allocation8 + $0x70] sm:$0xff]
    %v910 = vld [vmem:[#allocation8 + $0x78] sm:$0xff]
    %v911 = vld [vmem:[#allocation8 + $0x80] sm:$0xff]
    %v912 = vld [vmem:[#allocation8 + $0x88] sm:$0xff]
    %v913 = vld [vmem:[#allocation8 + $0x90] sm:$0xff]
    %v914 = vld [vmem:[#allocation8 + $0x98] sm:$0xff]
    %v915 = vld [vmem:[#allocation8 + $0xa0] sm:$0xff]
    %v916 = vld [vmem:[#allocation8 + $0xa8] sm:$0xff]
    %v917 = vld [vmem:[#allocation8 + $0xb0] sm:$0xff]
    %v918 = vld [vmem:[#allocation8 + $0xb8] sm:$0xff]
    %v919 = vld [vmem:[#allocation8 + $0xc0] sm:$0xff]
    %v920 = vld [vmem:[#allocation8 + $0xc8] sm:$0xff]
    %v921 = vld [vmem:[#allocation8 + $0xd0] sm:$0xff]
    %v922 = vld [vmem:[#allocation8 + $0xd8] sm:$0xff]
    %v923 = vld [vmem:[#allocation8 + $0xe0] sm:$0xff]
    %v924 = vld [vmem:[#allocation8 + $0xe8] sm:$0xff]
    %v925 = vld [vmem:[#allocation8 + $0xf0] sm:$0xff]
    %v926 = vld [vmem:[#allocation8 + $0xf8] sm:$0xff]
    %v927 = vld [vmem:[#allocation8 + $0x100] sm:$0xff]
    %v928 = vld [vmem:[#allocation8 + $0x108] sm:$0xff]
    %v929 = vld [vmem:[#allocation8 + $0x110] sm:$0xff]
    %v930 = vld [vmem:[#allocation8 + $0x118] sm:$0xff]
    %v931 = vld [vmem:[#allocation8 + $0x120] sm:$0xff]
    %v932 = vld [vmem:[#allocation8 + $0x128] sm:$0xff]
    %v933 = vld [vmem:[#allocation8 + $0x130] sm:$0xff]
    %v934 = vld [vmem:[#allocation8 + $0x138] sm:$0xff]
    %v935 = vld [vmem:[#allocation8 + $0x140] sm:$0xff]
    %v936 = vld [vmem:[#allocation8 + $0x148] sm:$0xff]
    %v937 = vld [vmem:[#allocation8 + $0x150] sm:$0xff]
    %v938 = vld [vmem:[#allocation8 + $0x158] sm:$0xff]
    %v939 = vld [vmem:[#allocation8 + $0x160] sm:$0xff]
    %v940 = vld [vmem:[#allocation8 + $0x168] sm:$0xff]
    %v941 = vld [vmem:[#allocation8 + $0x170] sm:$0xff]
    %v942 = vld [vmem:[#allocation8 + $0x178] sm:$0xff]
    %v943 = vld [vmem:[#allocation8 + $0x180] sm:$0xff]
    %v944 = vld [vmem:[#allocation8 + $0x188] sm:$0xff]
    %v945 = vld [vmem:[#allocation8 + $0x190] sm:$0xff]
    %v946 = vld [vmem:[#allocation8 + $0x198] sm:$0xff]
    %v947 = vld [vmem:[#allocation8 + $0x1a0] sm:$0xff]
    %v948 = vld [vmem:[#allocation8 + $0x1a8] sm:$0xff]
    %v949 = vld [vmem:[#allocation8 + $0x1b0] sm:$0xff]
    %v950 = vld [vmem:[#allocation8 + $0x1b8] sm:$0xff]
    %v951 = vld [vmem:[#allocation8 + $0x1c0] sm:$0xff]
    %v952 = vld [vmem:[#allocation8 + $0x1c8] sm:$0xff]
    %v953 = vld [vmem:[#allocation8 + $0x1d0] sm:$0xff]
    %v954 = vld [vmem:[#allocation8 + $0x1d8] sm:$0xff]
    %v955 = vld [vmem:[#allocation8 + $0x1e0] sm:$0xff]
    %v956 = vld [vmem:[#allocation8 + $0x1e8] sm:$0xff]
    %v957 = vld [vmem:[#allocation8 + $0x1f0] sm:$0xff]
    %v958 = vld [vmem:[#allocation8 + $0x1f8] sm:$0xff]
    %v959 = vld [vmem:[#allocation8 + $0x200] sm:$0xff]
    %v960 = vld [vmem:[#allocation8 + $0x208] sm:$0xff]
    %v961 = vld [vmem:[#allocation8 + $0x210] sm:$0xff]
    %v962 = vld [vmem:[#allocation8 + $0x218] sm:$0xff]
    %v963 = vld [vmem:[#allocation8 + $0x220] sm:$0xff]
    %v964 = vld [vmem:[#allocation8 + $0x228] sm:$0xff]
    %v965 = vld [vmem:[#allocation8 + $0x230] sm:$0xff]
    %v966 = vld [vmem:[#allocation8 + $0x238] sm:$0xff]
    %v967 = vld [vmem:[#allocation8 + $0x240] sm:$0xff]
    %v968 = vld [vmem:[#allocation8 + $0x248] sm:$0xff]
    %v969 = vld [vmem:[#allocation8 + $0x250] sm:$0xff]
    %v970 = vld [vmem:[#allocation8 + $0x258] sm:$0xff]
    %v971 = vld [vmem:[#allocation8 + $0x260] sm:$0xff]
    %v972 = vld [vmem:[#allocation8 + $0x268] sm:$0xff]
    %v973 = vld [vmem:[#allocation8 + $0x270] sm:$0xff]
    %v974 = vld [vmem:[#allocation8 + $0x278] sm:$0xff]
    %v975 = vld [vmem:[#allocation8 + $0x280] sm:$0xff]
    %v976 = vld [vmem:[#allocation8 + $0x288] sm:$0xff]
    %v977 = vld [vmem:[#allocation8 + $0x290] sm:$0xff]
    %v978 = vld [vmem:[#allocation8 + $0x298] sm:$0xff]
    %v979 = vld [vmem:[#allocation8 + $0x2a0] sm:$0xff]
    %v980 = vld [vmem:[#allocation8 + $0x2a8] sm:$0xff]
    %v981 = vld [vmem:[#allocation8 + $0x2b0] sm:$0xff]
    %v982 = vld [vmem:[#allocation8 + $0x2b8] sm:$0xff]
    %v983 = vld [vmem:[#allocation8 + $0x2c0] sm:$0xff]
    %v984 = vld [vmem:[#allocation8 + $0x2c8] sm:$0xff]
    %v985 = vld [vmem:[#allocation8 + $0x2d0] sm:$0xff]
    %v986 = vld [vmem:[#allocation8 + $0x2d8] sm:$0xff]
    %v987 = vld [vmem:[#allocation8 + $0x2e0] sm:$0xff]
    %v988 = vld [vmem:[#allocation8 + $0x2e8] sm:$0xff]
    %v989 = vld [vmem:[#allocation8 + $0x2f0] sm:$0xff]
    %v990 = vld [vmem:[#allocation8 + $0x2f8] sm:$0xff]
    %v991 = vld [vmem:[%s6] sm:$0x3f]
    %v993 = vlaneseq
    %v994 = vshrl.u32 %v993, 7
    %v995 = vsub.s32 0, %v994
    %v996 = vrot.slane %v991, %v995
    %v997 = vlaneseq
    %v998 = vshrl.u32 %v997, 7
    %v999 = vsub.s32 1, %v998
    %v1000 = vrot.slane %v991, %v999
    %v1001 = vlaneseq
    %v1002 = vshrl.u32 %v1001, 7
    %v1003 = vsub.s32 2, %v1002
    %v1004 = vrot.slane %v991, %v1003
    %v1005 = vlaneseq
    %v1006 = vshrl.u32 %v1005, 7
    %v1007 = vsub.s32 3, %v1006
    %v1008 = vrot.slane %v991, %v1007
    %v1009 = vlaneseq
    %v1010 = vshrl.u32 %v1009, 7
    %v1011 = vsub.s32 4, %v1010
    %v1012 = vrot.slane %v991, %v1011
    %v1013 = vlaneseq
    %v1014 = vshrl.u32 %v1013, 7
    %v1015 = vsub.s32 5, %v1014
    %v1016 = vrot.slane %v991, %v1015
    %1023 = vmatprep.subr.mxu0 %v896
    %1024 = vmatpush1.msra.mxu0 %v895
    %1025 = vmatprep.subr.mxu0 %v902
    %1026 = vmatpush1.msra.mxu0 %v901
    %1027 = vmatprep.subr.mxu0 %v908
    %1028 = vmatpush1.msra.mxu0 %v907
    %1029 = vmatprep.subr.mxu0 %v914
    %1030 = vmatpush1.msra.mxu0 %v913
    %1031 = vmatprep.subr.mxu0 %v920
    %1032 = vmatpush1.msra.mxu0 %v919
    %1033 = vmatprep.subr.mxu0 %v926
    %1034 = vmatpush1.msra.mxu0 %v925
    %1035 = vmatprep.subr.mxu0 %v932
    %1036 = vmatpush1.msra.mxu0 %v931
    %1037 = vmatprep.subr.mxu0 %v938
    %1038 = vmatpush1.msra.mxu0 %v937
    %1039 = vmatprep.subr.mxu0 %v944
    %1040 = vmatpush1.msra.mxu0 %v943
    %1041 = vmatprep.subr.mxu0 %v950
    %1042 = vmatpush1.msra.mxu0 %v949
    %1043 = vmatprep.subr.mxu0 %v956
    %1044 = vmatpush1.msra.mxu0 %v955
    %1045 = vmatprep.subr.mxu0 %v962
    %1046 = vmatpush1.msra.mxu0 %v961
    %1047 = vmatprep.subr.mxu0 %v968
    %1048 = vmatpush1.msra.mxu0 %v967
    %1049 = vmatprep.subr.mxu0 %v974
    %1050 = vmatpush1.msra.mxu0 %v973
    %1051 = vmatprep.subr.mxu0 %v980
    %1052 = vmatpush1.msra.mxu0 %v979
    %1053 = vmatprep.subr.mxu0 %v986
    %1054 = vmatpush1.msra.mxu0 %v985
    %1055 = vmatprep.subr.mxu0 0.0
    %1056 = vmatpush1.msra.mxu0 0.0
    %1057 = vmatprep.subr.mxu0 0.0
    %1058 = vmatpush1.msra.mxu0 0.0
    %1059 = vmatprep.subr.mxu0 0.0
    %1060 = vmatpush1.msra.mxu0 0.0
    %1061 = vmatprep.subr.mxu0 0.0
    %1062 = vmatpush1.msra.mxu0 0.0
    %1063 = vmatprep.subr.mxu0 0.0
    %1064 = vmatpush1.msra.mxu0 0.0
    %1065 = vmatprep.subr.mxu0 0.0
    %1066 = vmatpush1.msra.mxu0 0.0
    %1067 = vmatprep.subr.mxu0 0.0
    %1068 = vmatpush1.msra.mxu0 0.0
    %1069 = vmatprep.subr.mxu0 0.0
    %1070 = vmatpush1.msra.mxu0 0.0
    %1071 = vmatprep.subr.mxu0 0.0
    %1072 = vmatpush1.msra.mxu0 0.0
    %1073 = vmatprep.subr.mxu0 0.0
    %1074 = vmatpush1.msra.mxu0 0.0
    %1075 = vmatprep.subr.mxu0 0.0
    %1076 = vmatpush1.msra.mxu0 0.0
    %1077 = vmatprep.subr.mxu0 0.0
    %1078 = vmatpush1.msra.mxu0 0.0
    %1079 = vmatprep.subr.mxu0 0.0
    %1080 = vmatpush1.msra.mxu0 0.0
    %1081 = vmatprep.subr.mxu0 0.0
    %1082 = vmatpush1.msra.mxu0 0.0
    %1083 = vmatprep.subr.mxu0 0.0
    %1084 = vmatpush1.msra.mxu0 0.0
    %1085 = vmatprep.subr.mxu0 0.0
    %1086 = vmatpush1.msra.mxu0 0.0
    %1087 = vmatprep.mubr.f32.mxu0 0.0
    %1088 = vmatmul.mubr.f32.gmra.mrb[0].mxu0 %v894
    %v1089 = vpop.f32.mrb[0].mxu0
    %v1090 = vadd.f32 %v996, %v1089
    %v1091 = vpop.f32.mrb[0].mxu0
    %v1092 = vadd.f32 %v1000, %v1091
    %1093 = vdwg.mxu0
    %1094 = vmatprep.subr.mxu0 %v898
    %1095 = vmatpush1.msra.mxu0 %v897
    %1096 = vmatprep.subr.mxu0 %v904
    %1097 = vmatpush1.msra.mxu0 %v903
    %1098 = vmatprep.subr.mxu0 %v910
    %1099 = vmatpush1.msra.mxu0 %v909
    %1100 = vmatprep.subr.mxu0 %v916
    %1101 = vmatpush1.msra.mxu0 %v915
    %1102 = vmatprep.subr.mxu0 %v922
    %1103 = vmatpush1.msra.mxu0 %v921
    %1104 = vmatprep.subr.mxu0 %v928
    %1105 = vmatpush1.msra.mxu0 %v927
    %1106 = vmatprep.subr.mxu0 %v934
    %1107 = vmatpush1.msra.mxu0 %v933
    %1108 = vmatprep.subr.mxu0 %v940
    %1109 = vmatpush1.msra.mxu0 %v939
    %1110 = vmatprep.subr.mxu0 %v946
    %1111 = vmatpush1.msra.mxu0 %v945
    %1112 = vmatprep.subr.mxu0 %v952
    %1113 = vmatpush1.msra.mxu0 %v951
    %1114 = vmatprep.subr.mxu0 %v958
    %1115 = vmatpush1.msra.mxu0 %v957
    %1116 = vmatprep.subr.mxu0 %v964
    %1117 = vmatpush1.msra.mxu0 %v963
    %1118 = vmatprep.subr.mxu0 %v970
    %1119 = vmatpush1.msra.mxu0 %v969
    %1120 = vmatprep.subr.mxu0 %v976
    %1121 = vmatpush1.msra.mxu0 %v975
    %1122 = vmatprep.subr.mxu0 %v982
    %1123 = vmatpush1.msra.mxu0 %v981
    %1124 = vmatprep.subr.mxu0 %v988
    %1125 = vmatpush1.msra.mxu0 %v987
    %1126 = vmatprep.subr.mxu0 0.0
    %1127 = vmatpush1.msra.mxu0 0.0
    %1128 = vmatprep.subr.mxu0 0.0
    %1129 = vmatpush1.msra.mxu0 0.0
    %1130 = vmatprep.subr.mxu0 0.0
    %1131 = vmatpush1.msra.mxu0 0.0
    %1132 = vmatprep.subr.mxu0 0.0
    %1133 = vmatpush1.msra.mxu0 0.0
    %1134 = vmatprep.subr.mxu0 0.0
    %1135 = vmatpush1.msra.mxu0 0.0
    %1136 = vmatprep.subr.mxu0 0.0
    %1137 = vmatpush1.msra.mxu0 0.0
    %1138 = vmatprep.subr.mxu0 0.0
    %1139 = vmatpush1.msra.mxu0 0.0
    %1140 = vmatprep.subr.mxu0 0.0
    %1141 = vmatpush1.msra.mxu0 0.0
    %1142 = vmatprep.subr.mxu0 0.0
    %1143 = vmatpush1.msra.mxu0 0.0
    %1144 = vmatprep.subr.mxu0 0.0
    %1145 = vmatpush1.msra.mxu0 0.0
    %1146 = vmatprep.subr.mxu0 0.0
    %1147 = vmatpush1.msra.mxu0 0.0
    %1148 = vmatprep.subr.mxu0 0.0
    %1149 = vmatpush1.msra.mxu0 0.0
    %1150 = vmatprep.subr.mxu0 0.0
    %1151 = vmatpush1.msra.mxu0 0.0
    %1152 = vmatprep.subr.mxu0 0.0
    %1153 = vmatpush1.msra.mxu0 0.0
    %1154 = vmatprep.subr.mxu0 0.0
    %1155 = vmatpush1.msra.mxu0 0.0
    %1156 = vmatprep.subr.mxu0 0.0
    %1157 = vmatpush1.msra.mxu0 0.0
    %1158 = vmatprep.mubr.f32.mxu0 0.0
    %1159 = vmatmul.mubr.f32.gmra.mrb[0].mxu0 %v894
    %v1160 = vpop.f32.mrb[0].mxu0
    %v1161 = vadd.f32 %v1004, %v1160
    %v1162 = vpop.f32.mrb[0].mxu0
    %v1163 = vadd.f32 %v1008, %v1162
    %1164 = vdwg.mxu0
    %1165 = vmatprep.subr.mxu0 %v900
    %1166 = vmatpush1.msra.mxu0 %v899
    %1167 = vmatprep.subr.mxu0 %v906
    %1168 = vmatpush1.msra.mxu0 %v905
    %1169 = vmatprep.subr.mxu0 %v912
    %1170 = vmatpush1.msra.mxu0 %v911
    %1171 = vmatprep.subr.mxu0 %v918
    %1172 = vmatpush1.msra.mxu0 %v917
    %1173 = vmatprep.subr.mxu0 %v924
    %1174 = vmatpush1.msra.mxu0 %v923
    %1175 = vmatprep.subr.mxu0 %v930
    %1176 = vmatpush1.msra.mxu0 %v929
    %1177 = vmatprep.subr.mxu0 %v936
    %1178 = vmatpush1.msra.mxu0 %v935
    %1179 = vmatprep.subr.mxu0 %v942
    %1180 = vmatpush1.msra.mxu0 %v941
    %1181 = vmatprep.subr.mxu0 %v948
    %1182 = vmatpush1.msra.mxu0 %v947
    %1183 = vmatprep.subr.mxu0 %v954
    %1184 = vmatpush1.msra.mxu0 %v953
    %1185 = vmatprep.subr.mxu0 %v960
    %1186 = vmatpush1.msra.mxu0 %v959
    %1187 = vmatprep.subr.mxu0 %v966
    %1188 = vmatpush1.msra.mxu0 %v965
    %1189 = vmatprep.subr.mxu0 %v972
    %1190 = vmatpush1.msra.mxu0 %v971
    %1191 = vmatprep.subr.mxu0 %v978
    %1192 = vmatpush1.msra.mxu0 %v977
    %1193 = vmatprep.subr.mxu0 %v984
    %1194 = vmatpush1.msra.mxu0 %v983
    %1195 = vmatprep.subr.mxu0 %v990
    %1196 = vmatpush1.msra.mxu0 %v989
    %1197 = vmatprep.subr.mxu0 0.0
    %1198 = vmatpush1.msra.mxu0 0.0
    %1199 = vmatprep.subr.mxu0 0.0
    %1200 = vmatpush1.msra.mxu0 0.0
    %1201 = vmatprep.subr.mxu0 0.0
    %1202 = vmatpush1.msra.mxu0 0.0
    %1203 = vmatprep.subr.mxu0 0.0
    %1204 = vmatpush1.msra.mxu0 0.0
    %1205 = vmatprep.subr.mxu0 0.0
    %1206 = vmatpush1.msra.mxu0 0.0
    %1207 = vmatprep.subr.mxu0 0.0
    %1208 = vmatpush1.msra.mxu0 0.0
    %1209 = vmatprep.subr.mxu0 0.0
    %1210 = vmatpush1.msra.mxu0 0.0
    %1211 = vmatprep.subr.mxu0 0.0
    %1212 = vmatpush1.msra.mxu0 0.0
    %1213 = vmatprep.subr.mxu0 0.0
    %1214 = vmatpush1.msra.mxu0 0.0
    %1215 = vmatprep.subr.mxu0 0.0
    %1216 = vmatpush1.msra.mxu0 0.0
    %1217 = vmatprep.subr.mxu0 0.0
    %1218 = vmatpush1.msra.mxu0 0.0
    %1219 = vmatprep.subr.mxu0 0.0
    %1220 = vmatpush1.msra.mxu0 0.0
    %1221 = vmatprep.subr.mxu0 0.0
    %1222 = vmatpush1.msra.mxu0 0.0
    %1223 = vmatprep.subr.mxu0 0.0
    %1224 = vmatpush1.msra.mxu0 0.0
    %1225 = vmatprep.subr.mxu0 0.0
    %1226 = vmatpush1.msra.mxu0 0.0
    %1227 = vmatprep.subr.mxu0 0.0
    %1228 = vmatpush1.msra.mxu0 0.0
    %1229 = vmatprep.mubr.f32.mxu0 0.0
    %1230 = vmatmul.mubr.f32.gmra.mrb[0].mxu0 %v894
    %v1231 = vpop.f32.mrb[0].mxu0
    %v1232 = vadd.f32 %v1012, %v1231
    %v1233 = vpop.f32.mrb[0].mxu0
    %v1234 = vadd.f32 %v1016, %v1233
    %1235 = vdwg.mxu0
    %v1236 = vmul.f32 %v1090, %v1090
    %v1237 = vmul.f32 %v1092, %v1092
    %v1238 = vmul.f32 %v1161, %v1161
    %v1239 = vmul.f32 %v1163, %v1163
    %v1240 = vmul.f32 %v1232, %v1232
    %v1241 = vmul.f32 %v1234, %v1234
    %v1242 = vadd.f32 %v1236, %v1237
    %v1243 = vadd.f32 %v1242, %v1238
    %v1244 = vadd.f32 %v1243, %v1239
    %v1245 = vadd.f32 %v1244, %v1240
    %v1246 = vadd.f32 %v1245, %v1241
    %1247 = vadd.xlane.f32.xlu0 %v1246
    %v1248 = vpop.xlane.xlu0 %1247
    %v1249 = vmax.f32 %v1248, 1e-24
    %v1250 = vrsqrt.pop %v1249
    %v1251 = vmul.f32 %v1090, %v1250
    %v1252 = vmul.f32 %v1092, %v1250
    %v1253 = vmul.f32 %v1161, %v1250
    %v1254 = vmul.f32 %v1163, %v1250
    %v1255 = vmul.f32 %v1232, %v1250
    %v1256 = vmul.f32 %v1234, %v1250
    %1257 = vst [vmem:[#allocation10] sm:$0xff] %v1251
    %1258 = vst [vmem:[#allocation10 + $0x8] sm:$0xff] %v1252
    %1259 = vst [vmem:[#allocation10 + $0x10] sm:$0xff] %v1253
    %1260 = vst [vmem:[#allocation10 + $0x18] sm:$0xff] %v1254
    %1261 = vst [vmem:[#allocation10 + $0x20] sm:$0xff] %v1255
    %1262 = vst [vmem:[#allocation10 + $0x28] sm:$0xff] %v1256
    %1263 = vst [vmem:[#allocation11] sm:$0xff] %v892
    // Predicated region
    $region46: #{tpu_custom_call.1} parent=1 // pred_check
      _
    $region47: #{tpu_custom_call.1} parent=1 // pred_check_branch
      %1265 = sbr.rel (0) target = $region49
    $region48: #{tpu_custom_call.1} parent=1 // pred_region
      %s1267 = ssub.s32 768, 768
      %1268 = vsyncadd [#allocation4], %s1267
      %s1270 = sshll.u32 [#allocation10], 4
      %s1271 = int_to_ptr.vmem [resolvable:$true] %s1270
      %1273 = dma.vmem_to_hbm [thread:$0]  %s1271, 768, %s7, [#allocation4]
    $region49: #{tpu_custom_call.1} parent=1 // pred_fallthru
      _
    // Predicated region
    $region50: #{tpu_custom_call.1} parent=1 // pred_check
      _
    $region51: #{tpu_custom_call.1} parent=1 // pred_check_branch
      %1275 = sbr.rel (0) target = $region53
    $region52: #{tpu_custom_call.1} parent=1 // pred_region
      %s1277 = ssub.s32 128, 128
      %1278 = vsyncadd [#allocation12], %s1277
      %s1280 = sshll.u32 [#allocation11], 4
      %s1281 = int_to_ptr.vmem [resolvable:$true] %s1280
      %1283 = dma.vmem_to_hbm [thread:$0]  %s1281, 128, %s8, [#allocation12]
    $region53: #{tpu_custom_call.1} parent=1 // pred_fallthru
      _
    // Predicated region
    $region54: #{tpu_custom_call.1} parent=1 // pred_check
      _
    $region55: #{tpu_custom_call.1} parent=1 // pred_check_branch
      %1285 = sbr.rel (0) target = $region57
    $region56: #{tpu_custom_call.1} parent=1 // pred_region
      %1286 = dma.done [#allocation4], 768
    $region57: #{tpu_custom_call.1} parent=1 // pred_fallthru
      _
    // Predicated region
    $region58: #{tpu_custom_call.1} parent=1 // pred_check
      _
    $region59: #{tpu_custom_call.1} parent=1 // pred_check_branch
      %1288 = sbr.rel (0) target = $region61
    $region60: #{tpu_custom_call.1} parent=1 // pred_region
      %1289 = dma.done [#allocation12], 128
    $region61: #{tpu_custom_call.1} parent=1 // pred_fallthru
      _
    %1290 = vsyncpa [#allocation3], 1
    %1291 = vsyncpa [#allocation6], 1
    %1292 = vsyncpa [#allocation9], 1
    %1293 = vsyncpa [#allocation4], 1
    %1294 = vsyncpa [#allocation12], 1

</llo_original>
